<compile_context>
chip_gen: v7x
topology: tpu7x:2x2x1
jax: 0.10.0
libtpu: 0.0.40
codegen_flags: <defaults>
</compile_context>

<pallas_src>
import functools
import math

import jax
import jax.numpy as jnp
from jax.experimental import pallas as pl
from jax.experimental.pallas import tpu as pltpu


# ------------------------------------------------------------------ kernel

def _mm_attention_kernel(x_ref, wq_ref, bq_ref, wk_ref, bk_ref, wv_ref, bv_ref,
                         wd_ref, bd_ref, gamma_ref, beta_ref, o_ref,
                         *, num_heads, head_size, eps):
    """Fused multimodal attention for one batch element.

    x_ref: (1, S, H); w{q,k,v}: (H, A*H); b{q,k,v}: (1, A*H);
    wd: (A*H, H); bd/gamma/beta: (1, H); o_ref: (1, S, H).
    Note: per the module, attention_head_size == hidden_size (each head uses
    the full H feature width), so all_head_size == H * num_heads.
    """
    f32 = jnp.float32
    x = x_ref[0]                                            # (S, H)
    seq = x.shape[0]

    def dot(a, b):                                          # a @ b (2-D, MXU)
        return jax.lax.dot_general(a, b, (((1,), (0,)), ((), ())),
                                   preferred_element_type=f32)

    # Wide, lane-dense QKV projections: (S, H) @ (H, A*H) -> (S, 128 lanes).
    q = dot(x, wq_ref[...]) + bq_ref[...]
    k = dot(x, wk_ref[...]) + bk_ref[...]
    v = dot(x, wv_ref[...]) + bv_ref[...]

    wd = wd_ref[...]                                        # (A*H, H)
    scale = 1.0 / math.sqrt(head_size)                      # 1/sqrt(hidden_size)

    # Accumulate the output projection per head (splitting wd's rows) so the
    # per-head contexts never need to be concatenated.
    out = jnp.zeros((seq, wd.shape[1]), f32)
    for a in range(num_heads):                              # static unroll (A small)
        lo, hi = a * head_size, (a + 1) * head_size
        q_h = q[:, lo:hi]                                   # (S, H)
        k_h = k[:, lo:hi]
        v_h = v[:, lo:hi]
        # scores = q_h @ k_h^T : contract the feature dim of both operands
        # (avoids an explicit in-kernel transpose).
        s_h = jax.lax.dot_general(q_h, k_h, (((1,), (1,)), ((), ())),
                                  preferred_element_type=f32) * scale
        m = jnp.max(s_h, axis=-1, keepdims=True)
        e = jnp.exp(s_h - m)
        denom = jnp.sum(e, axis=-1, keepdims=True)
        p_h = e * pl.reciprocal(denom, approx=False)        # softmax(dim=-1)
        # TODO(synk): attention-probs dropout skipped (eval mode).
        c_h = dot(p_h, v_h)                                 # (S, H) context
        out = out + dot(c_h, wd[lo:hi, :])                  # dense, per-head rows

    # SelfOutput: dense bias + (dropout = identity) + residual + LayerNorm.
    h = out + bd_ref[...] + x
    u = jnp.mean(h, axis=-1, keepdims=True)
    d = h - u
    var = jnp.mean(d * d, axis=-1, keepdims=True)
    hn = d * jax.lax.rsqrt(var + eps)
    o_ref[0] = gamma_ref[...] * hn + beta_ref[...]


# ------------------------------------------------------------------ wrapper

def multimodal_attention(x, params, num_heads, eps=1e-12):
    """x: (B, S, H) float32 -> (B, S, H) float32."""
    B, S, H = x.shape
    AH = H * num_heads

    def fixed(shape):
        zeros = (0,) * len(shape)
        return pl.BlockSpec(shape, lambda b: zeros)

    in_specs = [
        pl.BlockSpec((1, S, H), lambda b: (b, 0, 0)),       # x
        fixed((H, AH)), fixed((1, AH)),                     # query
        fixed((H, AH)), fixed((1, AH)),                     # key
        fixed((H, AH)), fixed((1, AH)),                     # value
        fixed((AH, H)), fixed((1, H)),                      # output dense
        fixed((1, H)), fixed((1, H)),                       # layernorm gamma, beta
    ]
    out_spec = pl.BlockSpec((1, S, H), lambda b: (b, 0, 0))

    kernel = functools.partial(_mm_attention_kernel, num_heads=num_heads,
                               head_size=H, eps=eps)
    return pl.pallas_call(
        kernel,
        out_shape=jax.ShapeDtypeStruct((B, S, H), jnp.float32),
        grid=(B,),
        in_specs=in_specs,
        out_specs=out_spec,
        compiler_params=pltpu.CompilerParams(
            dimension_semantics=("parallel",)),              # v7x dual-TC split
    )(x, params["wq"], params["bq"], params["wk"], params["bk"],
      params["wv"], params["bv"], params["wd"], params["bd"],
      params["gamma"], params["beta"])


# --------------------------------------------------------------- parameters

def init_params(key, hidden_size, num_heads):
    AH = hidden_size * num_heads
    ks = jax.random.split(key, 8)

    def lin(kw, kb, din, dout):
        bound = 1.0 / math.sqrt(din)                         # nn.Linear default init
        w = jax.random.uniform(kw, (din, dout), jnp.float32, -bound, bound)
        b = jax.random.uniform(kb, (1, dout), jnp.float32, -bound, bound)
        return w, b

    wq, bq = lin(ks[0], ks[1], hidden_size, AH)
    wk, bk = lin(ks[2], ks[3], hidden_size, AH)
    wv, bv = lin(ks[4], ks[5], hidden_size, AH)
    wd, bd = lin(ks[6], ks[7], AH, hidden_size)
    return {
        "wq": wq, "bq": bq, "wk": wk, "bk": bk, "wv": wv, "bv": bv,
        "wd": wd, "bd": bd,
        "gamma": jnp.ones((1, hidden_size), jnp.float32),
        "beta": jnp.zeros((1, hidden_size), jnp.float32),
    }


# -------------------------------------------------------- pure-JAX reference

def ref_forward(x, p, num_heads, eps=1e-12):
    hp = jax.lax.Precision.HIGHEST
    B, S, H = x.shape
    A = num_heads
    q = jnp.einsum("bsh,hd->bsd", x, p["wq"], precision=hp) + p["bq"]
    k = jnp.einsum("bsh,hd->bsd", x, p["wk"], precision=hp) + p["bk"]
    v = jnp.einsum("bsh,hd->bsd", x, p["wv"], precision=hp) + p["bv"]
    qh = q.reshape(B, S, A, H).transpose(0, 2, 1, 3)
    kh = k.reshape(B, S, A, H).transpose(0, 2, 1, 3)
    vh = v.reshape(B, S, A, H).transpose(0, 2, 1, 3)
    scores = jnp.einsum("bash,bath->bast", qh, kh, precision=hp) / math.sqrt(H)
    probs = jax.nn.softmax(scores, axis=-1)
    ctx = jnp.einsum("bast,bath->bash", probs, vh, precision=hp)
    ctx = ctx.transpose(0, 2, 1, 3).reshape(B, S, A * H)
    out = jnp.einsum("bsd,dh->bsh", ctx, p["wd"], precision=hp) + p["bd"]
    h = out + x
    u = jnp.mean(h, axis=-1, keepdims=True)
    s = jnp.mean((h - u) ** 2, axis=-1, keepdims=True)
    hn = (h - u) / jnp.sqrt(s + eps)
    return p["gamma"] * hn + p["beta"]


# ----------------------------------------------------------------------- main

if __name__ == "__main__":
    HIDDEN, HEADS = 32, 4          # all_head_size = 128 (one full lane register)
    BATCH, SEQ = 2, 8

    key = jax.random.PRNGKey(0)
    kx, kp = jax.random.split(key)
    x = jax.random.normal(kx, (BATCH, SEQ, HIDDEN), jnp.float32)
    params = init_params(kp, HIDDEN, HEADS)

    out = multimodal_attention(x, params, HEADS)
    out = jax.block_until_ready(out)

    assert out.shape == (BATCH, SEQ, HIDDEN), out.shape
    assert bool(jnp.all(jnp.isfinite(out)))

    ref = ref_forward(x, params, HEADS)
    max_err = float(jnp.max(jnp.abs(out - ref)))
    assert bool(jnp.allclose(out, ref, atol=2e-2, rtol=2e-2)), max_err

    print("KERNEL_OK")
</pallas_src>

<mosaic_0001>
module attributes {stable_mosaic.version = 11 : i64} {
  func.func @_mm_attention_kernel(%arg0: i32, %arg1: memref<1x8x32xf32, #tpu.memory_space<vmem>>, %arg2: memref<32x128xf32, #tpu.memory_space<vmem>>, %arg3: memref<1x128xf32, #tpu.memory_space<vmem>>, %arg4: memref<32x128xf32, #tpu.memory_space<vmem>>, %arg5: memref<1x128xf32, #tpu.memory_space<vmem>>, %arg6: memref<32x128xf32, #tpu.memory_space<vmem>>, %arg7: memref<1x128xf32, #tpu.memory_space<vmem>>, %arg8: memref<128x32xf32, #tpu.memory_space<vmem>>, %arg9: memref<1x32xf32, #tpu.memory_space<vmem>>, %arg10: memref<1x32xf32, #tpu.memory_space<vmem>>, %arg11: memref<1x32xf32, #tpu.memory_space<vmem>>, %arg12: memref<1x8x32xf32, #tpu.memory_space<vmem>>) attributes {dimension_semantics = [#tpu.dimension_semantics<parallel>], iteration_bounds = array<i64: 2>, scalar_prefetch = 0 : i64, scratch_operands = 0 : i64, tpu.core_type = #tpu.core_type<tc>, window_params = [{transform_indices = @transform_0, window_bounds = array<i64: 1, 8, 32>}, {pipeline_mode = #tpu.pipeline_mode<synchronous>, transform_indices = @transform_1, window_bounds = array<i64: 32, 128>}, {pipeline_mode = #tpu.pipeline_mode<synchronous>, transform_indices = @transform_2, window_bounds = array<i64: 1, 128>}, {pipeline_mode = #tpu.pipeline_mode<synchronous>, transform_indices = @transform_3, window_bounds = array<i64: 32, 128>}, {pipeline_mode = #tpu.pipeline_mode<synchronous>, transform_indices = @transform_4, window_bounds = array<i64: 1, 128>}, {pipeline_mode = #tpu.pipeline_mode<synchronous>, transform_indices = @transform_5, window_bounds = array<i64: 32, 128>}, {pipeline_mode = #tpu.pipeline_mode<synchronous>, transform_indices = @transform_6, window_bounds = array<i64: 1, 128>}, {pipeline_mode = #tpu.pipeline_mode<synchronous>, transform_indices = @transform_7, window_bounds = array<i64: 128, 32>}, {pipeline_mode = #tpu.pipeline_mode<synchronous>, transform_indices = @transform_8, window_bounds = array<i64: 1, 32>}, {pipeline_mode = #tpu.pipeline_mode<synchronous>, transform_indices = @transform_9, window_bounds = array<i64: 1, 32>}, {pipeline_mode = #tpu.pipeline_mode<synchronous>, transform_indices = @transform_10, window_bounds = array<i64: 1, 32>}, {transform_indices = @transform_11, window_bounds = array<i64: 1, 8, 32>}]} {
    %c0 = arith.constant 0 : index
    %c0_0 = arith.constant 0 : index
    %c0_1 = arith.constant 0 : index
    %0 = vector.load %arg1[%c0, %c0_0, %c0_1] : memref<1x8x32xf32, #tpu.memory_space<vmem>>, vector<1x8x32xf32>
    %1 = vector.shape_cast %0 : vector<1x8x32xf32> to vector<8x32xf32>
    %c0_2 = arith.constant 0 : index
    %c0_3 = arith.constant 0 : index
    %2 = vector.load %arg2[%c0_2, %c0_3] : memref<32x128xf32, #tpu.memory_space<vmem>>, vector<32x128xf32>
    %cst = arith.constant dense<0.000000e+00> : vector<8x128xf32>
    %3 = tpu.matmul %1, %2, %cst {dimension_numbers = #tpu.dot_dimension_numbers<[1], [0], [0], [1], [0, 0, 1, 1], [], []>} : vector<8x32xf32>, vector<32x128xf32>, vector<8x128xf32> -> vector<8x128xf32>
    %c0_4 = arith.constant 0 : index
    %c0_5 = arith.constant 0 : index
    %4 = vector.load %arg3[%c0_4, %c0_5] : memref<1x128xf32, #tpu.memory_space<vmem>>, vector<1x128xf32>
    %5 = vector.broadcast %4 : vector<1x128xf32> to vector<8x128xf32>
    %6 = arith.addf %3, %5 : vector<8x128xf32>
    %c0_6 = arith.constant 0 : index
    %c0_7 = arith.constant 0 : index
    %7 = vector.load %arg4[%c0_6, %c0_7] : memref<32x128xf32, #tpu.memory_space<vmem>>, vector<32x128xf32>
    %cst_8 = arith.constant dense<0.000000e+00> : vector<8x128xf32>
    %8 = tpu.matmul %1, %7, %cst_8 {dimension_numbers = #tpu.dot_dimension_numbers<[1], [0], [0], [1], [0, 0, 1, 1], [], []>} : vector<8x32xf32>, vector<32x128xf32>, vector<8x128xf32> -> vector<8x128xf32>
    %c0_9 = arith.constant 0 : index
    %c0_10 = arith.constant 0 : index
    %9 = vector.load %arg5[%c0_9, %c0_10] : memref<1x128xf32, #tpu.memory_space<vmem>>, vector<1x128xf32>
    %10 = vector.broadcast %9 : vector<1x128xf32> to vector<8x128xf32>
    %11 = arith.addf %8, %10 : vector<8x128xf32>
    %c0_11 = arith.constant 0 : index
    %c0_12 = arith.constant 0 : index
    %12 = vector.load %arg6[%c0_11, %c0_12] : memref<32x128xf32, #tpu.memory_space<vmem>>, vector<32x128xf32>
    %cst_13 = arith.constant dense<0.000000e+00> : vector<8x128xf32>
    %13 = tpu.matmul %1, %12, %cst_13 {dimension_numbers = #tpu.dot_dimension_numbers<[1], [0], [0], [1], [0, 0, 1, 1], [], []>} : vector<8x32xf32>, vector<32x128xf32>, vector<8x128xf32> -> vector<8x128xf32>
    %c0_14 = arith.constant 0 : index
    %c0_15 = arith.constant 0 : index
    %14 = vector.load %arg7[%c0_14, %c0_15] : memref<1x128xf32, #tpu.memory_space<vmem>>, vector<1x128xf32>
    %15 = vector.broadcast %14 : vector<1x128xf32> to vector<8x128xf32>
    %16 = arith.addf %13, %15 : vector<8x128xf32>
    %c0_16 = arith.constant 0 : index
    %c0_17 = arith.constant 0 : index
    %17 = vector.load %arg8[%c0_16, %c0_17] : memref<128x32xf32, #tpu.memory_space<vmem>>, vector<128x32xf32>
    %cst_18 = arith.constant 0.000000e+00 : f32
    %18 = vector.broadcast %cst_18 : f32 to vector<8x32xf32>
    %19 = vector.extract_strided_slice %6 {offsets = [0, 0], sizes = [8, 32], strides = [1, 1]} : vector<8x128xf32> to vector<8x32xf32>
    %20 = vector.extract_strided_slice %11 {offsets = [0, 0], sizes = [8, 32], strides = [1, 1]} : vector<8x128xf32> to vector<8x32xf32>
    %21 = vector.extract_strided_slice %16 {offsets = [0, 0], sizes = [8, 32], strides = [1, 1]} : vector<8x128xf32> to vector<8x32xf32>
    %cst_19 = arith.constant dense<0.000000e+00> : vector<8x8xf32>
    %22 = tpu.matmul %19, %20, %cst_19 {dimension_numbers = #tpu.dot_dimension_numbers<[1], [1], [0], [0], [0, 0, 1, 0], [], []>} : vector<8x32xf32>, vector<8x32xf32>, vector<8x8xf32> -> vector<8x8xf32>
    %cst_20 = arith.constant 0.176776692 : f32
    %23 = vector.broadcast %cst_20 : f32 to vector<8x8xf32>
    %24 = arith.mulf %22, %23 : vector<8x8xf32>
    %cst_21 = arith.constant dense<0xFF800000> : vector<8xf32>
    %25 = vector.multi_reduction <maximumf>, %24, %cst_21 [1] : vector<8x8xf32> to vector<8xf32>
    %26 = vector.shape_cast %25 : vector<8xf32> to vector<8x1xf32>
    %27 = vector.broadcast %26 : vector<8x1xf32> to vector<8x8xf32>
    %28 = arith.subf %24, %27 : vector<8x8xf32>
    %29 = math.exp %28 : vector<8x8xf32>
    %cst_22 = arith.constant dense<0.000000e+00> : vector<8xf32>
    %30 = vector.multi_reduction <add>, %29, %cst_22 [1] : vector<8x8xf32> to vector<8xf32>
    %31 = vector.shape_cast %30 : vector<8xf32> to vector<8x1xf32>
    %32 = tpu.reciprocal %31 : vector<8x1xf32> -> vector<8x1xf32>
    %33 = vector.broadcast %32 : vector<8x1xf32> to vector<8x8xf32>
    %34 = arith.mulf %29, %33 : vector<8x8xf32>
    %cst_23 = arith.constant dense<0.000000e+00> : vector<8x32xf32>
    %35 = tpu.matmul %34, %21, %cst_23 {dimension_numbers = #tpu.dot_dimension_numbers<[1], [0], [0], [1], [0, 0, 1, 1], [], []>} : vector<8x8xf32>, vector<8x32xf32>, vector<8x32xf32> -> vector<8x32xf32>
    %36 = vector.extract_strided_slice %17 {offsets = [0, 0], sizes = [32, 32], strides = [1, 1]} : vector<128x32xf32> to vector<32x32xf32>
    %cst_24 = arith.constant dense<0.000000e+00> : vector<8x32xf32>
    %37 = tpu.matmul %35, %36, %cst_24 {dimension_numbers = #tpu.dot_dimension_numbers<[1], [0], [0], [1], [0, 0, 1, 1], [], []>} : vector<8x32xf32>, vector<32x32xf32>, vector<8x32xf32> -> vector<8x32xf32>
    %38 = arith.addf %18, %37 : vector<8x32xf32>
    %39 = vector.extract_strided_slice %6 {offsets = [0, 32], sizes = [8, 32], strides = [1, 1]} : vector<8x128xf32> to vector<8x32xf32>
    %40 = vector.extract_strided_slice %11 {offsets = [0, 32], sizes = [8, 32], strides = [1, 1]} : vector<8x128xf32> to vector<8x32xf32>
    %41 = vector.extract_strided_slice %16 {offsets = [0, 32], sizes = [8, 32], strides = [1, 1]} : vector<8x128xf32> to vector<8x32xf32>
    %cst_25 = arith.constant dense<0.000000e+00> : vector<8x8xf32>
    %42 = tpu.matmul %39, %40, %cst_25 {dimension_numbers = #tpu.dot_dimension_numbers<[1], [1], [0], [0], [0, 0, 1, 0], [], []>} : vector<8x32xf32>, vector<8x32xf32>, vector<8x8xf32> -> vector<8x8xf32>
    %cst_26 = arith.constant 0.176776692 : f32
    %43 = vector.broadcast %cst_26 : f32 to vector<8x8xf32>
    %44 = arith.mulf %42, %43 : vector<8x8xf32>
    %cst_27 = arith.constant dense<0xFF800000> : vector<8xf32>
    %45 = vector.multi_reduction <maximumf>, %44, %cst_27 [1] : vector<8x8xf32> to vector<8xf32>
    %46 = vector.shape_cast %45 : vector<8xf32> to vector<8x1xf32>
    %47 = vector.broadcast %46 : vector<8x1xf32> to vector<8x8xf32>
    %48 = arith.subf %44, %47 : vector<8x8xf32>
    %49 = math.exp %48 : vector<8x8xf32>
    %cst_28 = arith.constant dense<0.000000e+00> : vector<8xf32>
    %50 = vector.multi_reduction <add>, %49, %cst_28 [1] : vector<8x8xf32> to vector<8xf32>
    %51 = vector.shape_cast %50 : vector<8xf32> to vector<8x1xf32>
    %52 = tpu.reciprocal %51 : vector<8x1xf32> -> vector<8x1xf32>
    %53 = vector.broadcast %52 : vector<8x1xf32> to vector<8x8xf32>
    %54 = arith.mulf %49, %53 : vector<8x8xf32>
    %cst_29 = arith.constant dense<0.000000e+00> : vector<8x32xf32>
    %55 = tpu.matmul %54, %41, %cst_29 {dimension_numbers = #tpu.dot_dimension_numbers<[1], [0], [0], [1], [0, 0, 1, 1], [], []>} : vector<8x8xf32>, vector<8x32xf32>, vector<8x32xf32> -> vector<8x32xf32>
    %56 = vector.extract_strided_slice %17 {offsets = [32, 0], sizes = [32, 32], strides = [1, 1]} : vector<128x32xf32> to vector<32x32xf32>
    %cst_30 = arith.constant dense<0.000000e+00> : vector<8x32xf32>
    %57 = tpu.matmul %55, %56, %cst_30 {dimension_numbers = #tpu.dot_dimension_numbers<[1], [0], [0], [1], [0, 0, 1, 1], [], []>} : vector<8x32xf32>, vector<32x32xf32>, vector<8x32xf32> -> vector<8x32xf32>
    %58 = arith.addf %38, %57 : vector<8x32xf32>
    %59 = vector.extract_strided_slice %6 {offsets = [0, 64], sizes = [8, 32], strides = [1, 1]} : vector<8x128xf32> to vector<8x32xf32>
    %60 = vector.extract_strided_slice %11 {offsets = [0, 64], sizes = [8, 32], strides = [1, 1]} : vector<8x128xf32> to vector<8x32xf32>
    %61 = vector.extract_strided_slice %16 {offsets = [0, 64], sizes = [8, 32], strides = [1, 1]} : vector<8x128xf32> to vector<8x32xf32>
    %cst_31 = arith.constant dense<0.000000e+00> : vector<8x8xf32>
    %62 = tpu.matmul %59, %60, %cst_31 {dimension_numbers = #tpu.dot_dimension_numbers<[1], [1], [0], [0], [0, 0, 1, 0], [], []>} : vector<8x32xf32>, vector<8x32xf32>, vector<8x8xf32> -> vector<8x8xf32>
    %cst_32 = arith.constant 0.176776692 : f32
    %63 = vector.broadcast %cst_32 : f32 to vector<8x8xf32>
    %64 = arith.mulf %62, %63 : vector<8x8xf32>
    %cst_33 = arith.constant dense<0xFF800000> : vector<8xf32>
    %65 = vector.multi_reduction <maximumf>, %64, %cst_33 [1] : vector<8x8xf32> to vector<8xf32>
    %66 = vector.shape_cast %65 : vector<8xf32> to vector<8x1xf32>
    %67 = vector.broadcast %66 : vector<8x1xf32> to vector<8x8xf32>
    %68 = arith.subf %64, %67 : vector<8x8xf32>
    %69 = math.exp %68 : vector<8x8xf32>
    %cst_34 = arith.constant dense<0.000000e+00> : vector<8xf32>
    %70 = vector.multi_reduction <add>, %69, %cst_34 [1] : vector<8x8xf32> to vector<8xf32>
    %71 = vector.shape_cast %70 : vector<8xf32> to vector<8x1xf32>
    %72 = tpu.reciprocal %71 : vector<8x1xf32> -> vector<8x1xf32>
    %73 = vector.broadcast %72 : vector<8x1xf32> to vector<8x8xf32>
    %74 = arith.mulf %69, %73 : vector<8x8xf32>
    %cst_35 = arith.constant dense<0.000000e+00> : vector<8x32xf32>
    %75 = tpu.matmul %74, %61, %cst_35 {dimension_numbers = #tpu.dot_dimension_numbers<[1], [0], [0], [1], [0, 0, 1, 1], [], []>} : vector<8x8xf32>, vector<8x32xf32>, vector<8x32xf32> -> vector<8x32xf32>
    %76 = vector.extract_strided_slice %17 {offsets = [64, 0], sizes = [32, 32], strides = [1, 1]} : vector<128x32xf32> to vector<32x32xf32>
    %cst_36 = arith.constant dense<0.000000e+00> : vector<8x32xf32>
    %77 = tpu.matmul %75, %76, %cst_36 {dimension_numbers = #tpu.dot_dimension_numbers<[1], [0], [0], [1], [0, 0, 1, 1], [], []>} : vector<8x32xf32>, vector<32x32xf32>, vector<8x32xf32> -> vector<8x32xf32>
    %78 = arith.addf %58, %77 : vector<8x32xf32>
    %79 = vector.extract_strided_slice %6 {offsets = [0, 96], sizes = [8, 32], strides = [1, 1]} : vector<8x128xf32> to vector<8x32xf32>
    %80 = vector.extract_strided_slice %11 {offsets = [0, 96], sizes = [8, 32], strides = [1, 1]} : vector<8x128xf32> to vector<8x32xf32>
    %81 = vector.extract_strided_slice %16 {offsets = [0, 96], sizes = [8, 32], strides = [1, 1]} : vector<8x128xf32> to vector<8x32xf32>
    %cst_37 = arith.constant dense<0.000000e+00> : vector<8x8xf32>
    %82 = tpu.matmul %79, %80, %cst_37 {dimension_numbers = #tpu.dot_dimension_numbers<[1], [1], [0], [0], [0, 0, 1, 0], [], []>} : vector<8x32xf32>, vector<8x32xf32>, vector<8x8xf32> -> vector<8x8xf32>
    %cst_38 = arith.constant 0.176776692 : f32
    %83 = vector.broadcast %cst_38 : f32 to vector<8x8xf32>
    %84 = arith.mulf %82, %83 : vector<8x8xf32>
    %cst_39 = arith.constant dense<0xFF800000> : vector<8xf32>
    %85 = vector.multi_reduction <maximumf>, %84, %cst_39 [1] : vector<8x8xf32> to vector<8xf32>
    %86 = vector.shape_cast %85 : vector<8xf32> to vector<8x1xf32>
    %87 = vector.broadcast %86 : vector<8x1xf32> to vector<8x8xf32>
    %88 = arith.subf %84, %87 : vector<8x8xf32>
    %89 = math.exp %88 : vector<8x8xf32>
    %cst_40 = arith.constant dense<0.000000e+00> : vector<8xf32>
    %90 = vector.multi_reduction <add>, %89, %cst_40 [1] : vector<8x8xf32> to vector<8xf32>
    %91 = vector.shape_cast %90 : vector<8xf32> to vector<8x1xf32>
    %92 = tpu.reciprocal %91 : vector<8x1xf32> -> vector<8x1xf32>
    %93 = vector.broadcast %92 : vector<8x1xf32> to vector<8x8xf32>
    %94 = arith.mulf %89, %93 : vector<8x8xf32>
    %cst_41 = arith.constant dense<0.000000e+00> : vector<8x32xf32>
    %95 = tpu.matmul %94, %81, %cst_41 {dimension_numbers = #tpu.dot_dimension_numbers<[1], [0], [0], [1], [0, 0, 1, 1], [], []>} : vector<8x8xf32>, vector<8x32xf32>, vector<8x32xf32> -> vector<8x32xf32>
    %96 = vector.extract_strided_slice %17 {offsets = [96, 0], sizes = [32, 32], strides = [1, 1]} : vector<128x32xf32> to vector<32x32xf32>
    %cst_42 = arith.constant dense<0.000000e+00> : vector<8x32xf32>
    %97 = tpu.matmul %95, %96, %cst_42 {dimension_numbers = #tpu.dot_dimension_numbers<[1], [0], [0], [1], [0, 0, 1, 1], [], []>} : vector<8x32xf32>, vector<32x32xf32>, vector<8x32xf32> -> vector<8x32xf32>
    %98 = arith.addf %78, %97 : vector<8x32xf32>
    %c0_43 = arith.constant 0 : index
    %c0_44 = arith.constant 0 : index
    %99 = vector.load %arg9[%c0_43, %c0_44] : memref<1x32xf32, #tpu.memory_space<vmem>>, vector<1x32xf32>
    %100 = vector.broadcast %99 : vector<1x32xf32> to vector<8x32xf32>
    %101 = arith.addf %98, %100 : vector<8x32xf32>
    %102 = arith.addf %101, %1 : vector<8x32xf32>
    %cst_45 = arith.constant dense<0.000000e+00> : vector<8xf32>
    %103 = vector.multi_reduction <add>, %102, %cst_45 [1] : vector<8x32xf32> to vector<8xf32>
    %104 = vector.shape_cast %103 : vector<8xf32> to vector<8x1xf32>
    %cst_46 = arith.constant 3.200000e+01 : f32
    %105 = vector.broadcast %cst_46 : f32 to vector<8x1xf32>
    %106 = arith.divf %104, %105 : vector<8x1xf32>
    %107 = vector.broadcast %106 : vector<8x1xf32> to vector<8x32xf32>
    %108 = arith.subf %102, %107 : vector<8x32xf32>
    %109 = arith.mulf %108, %108 : vector<8x32xf32>
    %cst_47 = arith.constant dense<0.000000e+00> : vector<8xf32>
    %110 = vector.multi_reduction <add>, %109, %cst_47 [1] : vector<8x32xf32> to vector<8xf32>
    %111 = vector.shape_cast %110 : vector<8xf32> to vector<8x1xf32>
    %cst_48 = arith.constant 3.200000e+01 : f32
    %112 = vector.broadcast %cst_48 : f32 to vector<8x1xf32>
    %113 = arith.divf %111, %112 : vector<8x1xf32>
    %cst_49 = arith.constant 9.99999996E-13 : f32
    %114 = vector.broadcast %cst_49 : f32 to vector<8x1xf32>
    %115 = arith.addf %113, %114 : vector<8x1xf32>
    %116 = math.rsqrt %115 : vector<8x1xf32>
    %117 = vector.broadcast %116 : vector<8x1xf32> to vector<8x32xf32>
    %118 = arith.mulf %108, %117 : vector<8x32xf32>
    %c0_50 = arith.constant 0 : index
    %c0_51 = arith.constant 0 : index
    %119 = vector.load %arg10[%c0_50, %c0_51] : memref<1x32xf32, #tpu.memory_space<vmem>>, vector<1x32xf32>
    %120 = vector.broadcast %119 : vector<1x32xf32> to vector<8x32xf32>
    %121 = arith.mulf %120, %118 : vector<8x32xf32>
    %c0_52 = arith.constant 0 : index
    %c0_53 = arith.constant 0 : index
    %122 = vector.load %arg11[%c0_52, %c0_53] : memref<1x32xf32, #tpu.memory_space<vmem>>, vector<1x32xf32>
    %123 = vector.broadcast %122 : vector<1x32xf32> to vector<8x32xf32>
    %124 = arith.addf %121, %123 : vector<8x32xf32>
    %c0_54 = arith.constant 0 : index
    %c0_55 = arith.constant 0 : index
    %c0_56 = arith.constant 0 : index
    %125 = vector.load %arg12[%c0_54, %c0_55, %c0_56] : memref<1x8x32xf32, #tpu.memory_space<vmem>>, vector<1x8x32xf32>
    %126 = vector.shape_cast %125 : vector<1x8x32xf32> to vector<8x32xf32>
    %127 = vector.shape_cast %124 : vector<8x32xf32> to vector<1x8x32xf32>
    tpu.vector_store %arg12[%c0_54, %c0_55, %c0_56], %127 {strides = array<i32>} : memref<1x8x32xf32, #tpu.memory_space<vmem>>, vector<1x8x32xf32>,
    return
  }
  func.func @transform_0(%arg0: i32) -> (i32, i32, i32) {
    %c0_i32 = arith.constant 0 : i32
    %c0_i32_0 = arith.constant 0 : i32
    %c0_i32_1 = arith.constant 0 : i32
    return %arg0, %c0_i32, %c0_i32_0 : i32, i32, i32
  }
  func.func @transform_1(%arg0: i32) -> (i32, i32) {
    %c0_i32 = arith.constant 0 : i32
    %c0_i32_0 = arith.constant 0 : i32
    %c0_i32_1 = arith.constant 0 : i32
    return %c0_i32, %c0_i32_0 : i32, i32
  }
  func.func @transform_2(%arg0: i32) -> (i32, i32) {
    %c0_i32 = arith.constant 0 : i32
    %c0_i32_0 = arith.constant 0 : i32
    %c0_i32_1 = arith.constant 0 : i32
    return %c0_i32, %c0_i32_0 : i32, i32
  }
  func.func @transform_3(%arg0: i32) -> (i32, i32) {
    %c0_i32 = arith.constant 0 : i32
    %c0_i32_0 = arith.constant 0 : i32
    %c0_i32_1 = arith.constant 0 : i32
    return %c0_i32, %c0_i32_0 : i32, i32
  }
  func.func @transform_4(%arg0: i32) -> (i32, i32) {
    %c0_i32 = arith.constant 0 : i32
    %c0_i32_0 = arith.constant 0 : i32
    %c0_i32_1 = arith.constant 0 : i32
    return %c0_i32, %c0_i32_0 : i32, i32
  }
  func.func @transform_5(%arg0: i32) -> (i32, i32) {
    %c0_i32 = arith.constant 0 : i32
    %c0_i32_0 = arith.constant 0 : i32
    %c0_i32_1 = arith.constant 0 : i32
    return %c0_i32, %c0_i32_0 : i32, i32
  }
  func.func @transform_6(%arg0: i32) -> (i32, i32) {
    %c0_i32 = arith.constant 0 : i32
    %c0_i32_0 = arith.constant 0 : i32
    %c0_i32_1 = arith.constant 0 : i32
    return %c0_i32, %c0_i32_0 : i32, i32
  }
  func.func @transform_7(%arg0: i32) -> (i32, i32) {
    %c0_i32 = arith.constant 0 : i32
    %c0_i32_0 = arith.constant 0 : i32
    %c0_i32_1 = arith.constant 0 : i32
    return %c0_i32, %c0_i32_0 : i32, i32
  }
  func.func @transform_8(%arg0: i32) -> (i32, i32) {
    %c0_i32 = arith.constant 0 : i32
    %c0_i32_0 = arith.constant 0 : i32
    %c0_i32_1 = arith.constant 0 : i32
    return %c0_i32, %c0_i32_0 : i32, i32
  }
  func.func @transform_9(%arg0: i32) -> (i32, i32) {
    %c0_i32 = arith.constant 0 : i32
    %c0_i32_0 = arith.constant 0 : i32
    %c0_i32_1 = arith.constant 0 : i32
    return %c0_i32, %c0_i32_0 : i32, i32
  }
  func.func @transform_10(%arg0: i32) -> (i32, i32) {
    %c0_i32 = arith.constant 0 : i32
    %c0_i32_0 = arith.constant 0 : i32
    %c0_i32_1 = arith.constant 0 : i32
    return %c0_i32, %c0_i32_0 : i32, i32
  }
  func.func @transform_11(%arg0: i32) -> (i32, i32, i32) {
    %c0_i32 = arith.constant 0 : i32
    %c0_i32_0 = arith.constant 0 : i32
    %c0_i32_1 = arith.constant 0 : i32
    return %arg0, %c0_i32, %c0_i32_0 : i32, i32, i32
  }
}

</mosaic_0001>

<llo_original>
// kernel: tpu_custom_call.1
$region0: #{tpu_custom_call.1}
  #allocation0 [shape = 'u32[]', space=smem, size = 0x4, offset = 0x4, fixed_abs, tag = 'smem constant byte address 0x4 - core index']
  #allocation1 [shape = 'u32[144,128]{1,0:T(1,128)}', space=vmem, size = 0x12000, scoped, tag = 'internal scratch']
  %s0 = inlined_call_operand.vmem [shape: f32[2,8,32], index: 0, kind: input, shape index: {}]
  %s1 = inlined_call_operand.vmem [shape: f32[32,128], index: 1, kind: input, shape index: {}]
  %s2 = inlined_call_operand.vmem [shape: f32[1,128], index: 2, kind: input, shape index: {}]
  %s3 = inlined_call_operand.vmem [shape: f32[32,128], index: 3, kind: input, shape index: {}]
  %s4 = inlined_call_operand.vmem [shape: f32[1,128], index: 4, kind: input, shape index: {}]
  %s5 = inlined_call_operand.vmem [shape: f32[32,128], index: 5, kind: input, shape index: {}]
  %s6 = inlined_call_operand.vmem [shape: f32[1,128], index: 6, kind: input, shape index: {}]
  %s7 = inlined_call_operand.vmem [shape: f32[128,32], index: 7, kind: input, shape index: {}]
  %s8 = inlined_call_operand.vmem [shape: f32[1,32], index: 8, kind: input, shape index: {}]
  %s9 = inlined_call_operand.vmem [shape: f32[1,32], index: 9, kind: input, shape index: {}]
  %s10 = inlined_call_operand.vmem [shape: f32[1,32], index: 10, kind: input, shape index: {}]
  %s11 = inlined_call_operand.hbm [shape: f32[2,8,32], index: 11, kind: output, shape index: {}]
  %s12 = sld [smem:[#allocation0]]
  $region77: #{tpu_custom_call.1} parent=0
    _
  %s14 = ssub.s32 1, %s12
  %s15 = scalar_select 0, %s14, %s12
  $region1: #{tpu_custom_call.1} parent=0
    #allocation2 [shape = 'u8[8192]{0}', space=vmem, size = 0x2000, scoped, tag = 'output window, operand 0']
    #allocation3 [shape = 's32[2]{0}', space=sflag, size = 0x8, scoped, tag = 'scoped memory for tpu_custom_call.1']
    %16 = vsyncpa [#allocation3], 0
    %s17 = scalar_lea.sflag [#allocation3], 1
    %18 = vsyncpa %s17, 0
    loop: start=0, step=1, limit=4
    $region2: #{tpu_custom_call.1} parent=1 // loop_pre_header
      _
    $region3: #{tpu_custom_call.1} parent=1 // loop_header
      %s20 = sphi 0, %s24
      %p21 = scmp.ge.s32.totalorder %s20, 4
      %s30 = sphi 0, %s32
      %s33 = sphi 0, %s30
      %s34 = sphi 0, %s33
      %s50 = sphi 0, %s34
      %s54 = sphi 0, %s54
      %s56 = sphi 0, %s54
      %s57 = sphi 0, %s56
      %s71 = sphi 0, %s57
      %s75 = sphi 0, %s75
      %s77 = sphi 0, %s75
      %s78 = sphi 0, %s77
      %s92 = sphi 0, %s78
      %s96 = sphi 0, %s96
      %s98 = sphi 0, %s96
      %s99 = sphi 0, %s98
      %s113 = sphi 0, %s99
      %s117 = sphi 0, %s117
      %s119 = sphi 0, %s117
      %s120 = sphi 0, %s119
      %s134 = sphi 0, %s120
      %s138 = sphi 0, %s138
      %s140 = sphi 0, %s138
      %s141 = sphi 0, %s140
      %s155 = sphi 0, %s141
      %s159 = sphi 0, %s159
      %s161 = sphi 0, %s159
      %s162 = sphi 0, %s161
      %s176 = sphi 0, %s162
      %s180 = sphi 0, %s180
      %s182 = sphi 0, %s180
      %s183 = sphi 0, %s182
      %s197 = sphi 0, %s183
      %s201 = sphi 0, %s201
      %s203 = sphi 0, %s201
      %s204 = sphi 0, %s203
      %s218 = sphi 0, %s204
      %s222 = sphi 0, %s222
      %s224 = sphi 0, %s222
      %s225 = sphi 0, %s224
      %s239 = sphi 0, %s225
      %s243 = sphi 0, %s243
      %s245 = sphi 0, %s243
      %s246 = sphi 0, %s245
      %s260 = sphi 0, %s246
      %s266 = sphi 0, %s268
      %s269 = sphi 0, %s266
      %s270 = sphi 0, %s269
      %s286 = sphi 0, %s270
    $region4: #{tpu_custom_call.1} parent=1 // loop_header_branch
      %23 = sbr.rel (%p21) target = $region8
    $region5: #{tpu_custom_call.1} parent=1 // loop_body
      %s25 = ssub.s32 %s20, 1
      %s26 = ssub.s32 %s20, 2
      %s27 = sadd.s32 %s20, 1
      %s28 = ssub.s32 %s20, %s27
      %p29 = scmp.eq.s32.totalorder %s28, 0
      %s31 = sadd.s32 %s30, 1
      %s32 = scalar_select %p29, %s30, %s31
      %p35 = pneg %p29
      %p36 = scmp.eq.s32.totalorder %s20, 1
      %p37 = por %p35, %p36
      %p38 = scmp.ne.s32.totalorder %s30, %s33
      %p39 = scmp.eq.s32.totalorder %s20, 0
      %p40 = por %p38, %p39
      %p41 = scmp.ne.s32.totalorder %s30, %s33
      %p42 = scmp.eq.s32.totalorder %s25, 1
      %p43 = por %p41, %p42
      %p44 = scmp.ne.s32.totalorder %s33, %s34
      %p45 = scmp.eq.s32.totalorder %s25, 0
      %p46 = por %p44, %p45
      %p47 = scmp.ne.s32.totalorder %s33, %s34
      %p48 = scmp.eq.s32.totalorder %s26, 1
      %p49 = por %p47, %p48
      %p51 = scmp.ne.s32.totalorder %s34, %s50
      %p52 = scmp.eq.s32.totalorder %s26, 0
      %p53 = por %p51, %p52
      %s55 = sadd.s32 %s54, 1
      %p58 = scmp.eq.s32.totalorder %s20, 1
      %p59 = scmp.ne.s32.totalorder %s54, %s56
      %p60 = scmp.eq.s32.totalorder %s20, 0
      %p61 = por %p59, %p60
      %p62 = scmp.ne.s32.totalorder %s54, %s56
      %p63 = scmp.eq.s32.totalorder %s25, 1
      %p64 = por %p62, %p63
      %p65 = scmp.ne.s32.totalorder %s56, %s57
      %p66 = scmp.eq.s32.totalorder %s25, 0
      %p67 = por %p65, %p66
      %p68 = scmp.ne.s32.totalorder %s56, %s57
      %p69 = scmp.eq.s32.totalorder %s26, 1
      %p70 = por %p68, %p69
      %p72 = scmp.ne.s32.totalorder %s57, %s71
      %p73 = scmp.eq.s32.totalorder %s26, 0
      %p74 = por %p72, %p73
      %s76 = sadd.s32 %s75, 1
      %p79 = scmp.eq.s32.totalorder %s20, 1
      %p80 = scmp.ne.s32.totalorder %s75, %s77
      %p81 = scmp.eq.s32.totalorder %s20, 0
      %p82 = por %p80, %p81
      %p83 = scmp.ne.s32.totalorder %s75, %s77
      %p84 = scmp.eq.s32.totalorder %s25, 1
      %p85 = por %p83, %p84
      %p86 = scmp.ne.s32.totalorder %s77, %s78
      %p87 = scmp.eq.s32.totalorder %s25, 0
      %p88 = por %p86, %p87
      %p89 = scmp.ne.s32.totalorder %s77, %s78
      %p90 = scmp.eq.s32.totalorder %s26, 1
      %p91 = por %p89, %p90
      %p93 = scmp.ne.s32.totalorder %s78, %s92
      %p94 = scmp.eq.s32.totalorder %s26, 0
      %p95 = por %p93, %p94
      %s97 = sadd.s32 %s96, 1
      %p100 = scmp.eq.s32.totalorder %s20, 1
      %p101 = scmp.ne.s32.totalorder %s96, %s98
      %p102 = scmp.eq.s32.totalorder %s20, 0
      %p103 = por %p101, %p102
      %p104 = scmp.ne.s32.totalorder %s96, %s98
      %p105 = scmp.eq.s32.totalorder %s25, 1
      %p106 = por %p104, %p105
      %p107 = scmp.ne.s32.totalorder %s98, %s99
      %p108 = scmp.eq.s32.totalorder %s25, 0
      %p109 = por %p107, %p108
      %p110 = scmp.ne.s32.totalorder %s98, %s99
      %p111 = scmp.eq.s32.totalorder %s26, 1
      %p112 = por %p110, %p111
      %p114 = scmp.ne.s32.totalorder %s99, %s113
      %p115 = scmp.eq.s32.totalorder %s26, 0
      %p116 = por %p114, %p115
      %s118 = sadd.s32 %s117, 1
      %p121 = scmp.eq.s32.totalorder %s20, 1
      %p122 = scmp.ne.s32.totalorder %s117, %s119
      %p123 = scmp.eq.s32.totalorder %s20, 0
      %p124 = por %p122, %p123
      %p125 = scmp.ne.s32.totalorder %s117, %s119
      %p126 = scmp.eq.s32.totalorder %s25, 1
      %p127 = por %p125, %p126
      %p128 = scmp.ne.s32.totalorder %s119, %s120
      %p129 = scmp.eq.s32.totalorder %s25, 0
      %p130 = por %p128, %p129
      %p131 = scmp.ne.s32.totalorder %s119, %s120
      %p132 = scmp.eq.s32.totalorder %s26, 1
      %p133 = por %p131, %p132
      %p135 = scmp.ne.s32.totalorder %s120, %s134
      %p136 = scmp.eq.s32.totalorder %s26, 0
      %p137 = por %p135, %p136
      %s139 = sadd.s32 %s138, 1
      %p142 = scmp.eq.s32.totalorder %s20, 1
      %p143 = scmp.ne.s32.totalorder %s138, %s140
      %p144 = scmp.eq.s32.totalorder %s20, 0
      %p145 = por %p143, %p144
      %p146 = scmp.ne.s32.totalorder %s138, %s140
      %p147 = scmp.eq.s32.totalorder %s25, 1
      %p148 = por %p146, %p147
      %p149 = scmp.ne.s32.totalorder %s140, %s141
      %p150 = scmp.eq.s32.totalorder %s25, 0
      %p151 = por %p149, %p150
      %p152 = scmp.ne.s32.totalorder %s140, %s141
      %p153 = scmp.eq.s32.totalorder %s26, 1
      %p154 = por %p152, %p153
      %p156 = scmp.ne.s32.totalorder %s141, %s155
      %p157 = scmp.eq.s32.totalorder %s26, 0
      %p158 = por %p156, %p157
      %s160 = sadd.s32 %s159, 1
      %p163 = scmp.eq.s32.totalorder %s20, 1
      %p164 = scmp.ne.s32.totalorder %s159, %s161
      %p165 = scmp.eq.s32.totalorder %s20, 0
      %p166 = por %p164, %p165
      %p167 = scmp.ne.s32.totalorder %s159, %s161
      %p168 = scmp.eq.s32.totalorder %s25, 1
      %p169 = por %p167, %p168
      %p170 = scmp.ne.s32.totalorder %s161, %s162
      %p171 = scmp.eq.s32.totalorder %s25, 0
      %p172 = por %p170, %p171
      %p173 = scmp.ne.s32.totalorder %s161, %s162
      %p174 = scmp.eq.s32.totalorder %s26, 1
      %p175 = por %p173, %p174
      %p177 = scmp.ne.s32.totalorder %s162, %s176
      %p178 = scmp.eq.s32.totalorder %s26, 0
      %p179 = por %p177, %p178
      %s181 = sadd.s32 %s180, 1
      %p184 = scmp.eq.s32.totalorder %s20, 1
      %p185 = scmp.ne.s32.totalorder %s180, %s182
      %p186 = scmp.eq.s32.totalorder %s20, 0
      %p187 = por %p185, %p186
      %p188 = scmp.ne.s32.totalorder %s180, %s182
      %p189 = scmp.eq.s32.totalorder %s25, 1
      %p190 = por %p188, %p189
      %p191 = scmp.ne.s32.totalorder %s182, %s183
      %p192 = scmp.eq.s32.totalorder %s25, 0
      %p193 = por %p191, %p192
      %p194 = scmp.ne.s32.totalorder %s182, %s183
      %p195 = scmp.eq.s32.totalorder %s26, 1
      %p196 = por %p194, %p195
      %p198 = scmp.ne.s32.totalorder %s183, %s197
      %p199 = scmp.eq.s32.totalorder %s26, 0
      %p200 = por %p198, %p199
      %s202 = sadd.s32 %s201, 1
      %p205 = scmp.eq.s32.totalorder %s20, 1
      %p206 = scmp.ne.s32.totalorder %s201, %s203
      %p207 = scmp.eq.s32.totalorder %s20, 0
      %p208 = por %p206, %p207
      %p209 = scmp.ne.s32.totalorder %s201, %s203
      %p210 = scmp.eq.s32.totalorder %s25, 1
      %p211 = por %p209, %p210
      %p212 = scmp.ne.s32.totalorder %s203, %s204
      %p213 = scmp.eq.s32.totalorder %s25, 0
      %p214 = por %p212, %p213
      %p215 = scmp.ne.s32.totalorder %s203, %s204
      %p216 = scmp.eq.s32.totalorder %s26, 1
      %p217 = por %p215, %p216
      %p219 = scmp.ne.s32.totalorder %s204, %s218
      %p220 = scmp.eq.s32.totalorder %s26, 0
      %p221 = por %p219, %p220
      %s223 = sadd.s32 %s222, 1
      %p226 = scmp.eq.s32.totalorder %s20, 1
      %p227 = scmp.ne.s32.totalorder %s222, %s224
      %p228 = scmp.eq.s32.totalorder %s20, 0
      %p229 = por %p227, %p228
      %p230 = scmp.ne.s32.totalorder %s222, %s224
      %p231 = scmp.eq.s32.totalorder %s25, 1
      %p232 = por %p230, %p231
      %p233 = scmp.ne.s32.totalorder %s224, %s225
      %p234 = scmp.eq.s32.totalorder %s25, 0
      %p235 = por %p233, %p234
      %p236 = scmp.ne.s32.totalorder %s224, %s225
      %p237 = scmp.eq.s32.totalorder %s26, 1
      %p238 = por %p236, %p237
      %p240 = scmp.ne.s32.totalorder %s225, %s239
      %p241 = scmp.eq.s32.totalorder %s26, 0
      %p242 = por %p240, %p241
      %s244 = sadd.s32 %s243, 1
      %p247 = scmp.eq.s32.totalorder %s20, 1
      %p248 = scmp.ne.s32.totalorder %s243, %s245
      %p249 = scmp.eq.s32.totalorder %s20, 0
      %p250 = por %p248, %p249
      %p251 = scmp.ne.s32.totalorder %s243, %s245
      %p252 = scmp.eq.s32.totalorder %s25, 1
      %p253 = por %p251, %p252
      %p254 = scmp.ne.s32.totalorder %s245, %s246
      %p255 = scmp.eq.s32.totalorder %s25, 0
      %p256 = por %p254, %p255
      %p257 = scmp.ne.s32.totalorder %s245, %s246
      %p258 = scmp.eq.s32.totalorder %s26, 1
      %p259 = por %p257, %p258
      %p261 = scmp.ne.s32.totalorder %s246, %s260
      %p262 = scmp.eq.s32.totalorder %s26, 0
      %p263 = por %p261, %p262
      %s264 = ssub.s32 %s20, %s27
      %p265 = scmp.eq.s32.totalorder %s264, 0
      %s267 = sadd.s32 %s266, 1
      %s268 = scalar_select %p265, %s266, %s267
      %p271 = pneg %p265
      %p272 = scmp.eq.s32.totalorder %s20, 1
      %p273 = por %p271, %p272
      %p274 = scmp.ne.s32.totalorder %s266, %s269
      %p275 = scmp.eq.s32.totalorder %s20, 0
      %p276 = por %p274, %p275
      %p277 = scmp.ne.s32.totalorder %s266, %s269
      %p278 = scmp.eq.s32.totalorder %s25, 1
      %p279 = por %p277, %p278
      %p280 = scmp.ne.s32.totalorder %s269, %s270
      %p281 = scmp.eq.s32.totalorder %s25, 0
      %p282 = por %p280, %p281
      %p283 = scmp.ne.s32.totalorder %s269, %s270
      %p284 = scmp.eq.s32.totalorder %s26, 1
      %p285 = por %p283, %p284
      %p287 = scmp.ne.s32.totalorder %s270, %s286
      %p288 = scmp.eq.s32.totalorder %s26, 0
      %p289 = por %p287, %p288
      %p290 = scmp.le.s32.totalorder 1, %s20
      %p291 = scmp.lt.s32.totalorder %s20, 3
      %p292 = pnand %p290, %p291
      %p293 = pneg %p292
      // Predicated region
      $region9: #{tpu_custom_call.1} parent=5 // pred_check
        _
      $region10: #{tpu_custom_call.1} parent=5 // pred_check_branch
        %295 = sbr.rel (%p292) target = $region12
      $region11: #{tpu_custom_call.1} parent=5 // pred_region
        %s296 = ssub.s32 %s20, 1
        // Predicated region
        $region13: #{tpu_custom_call.1} parent=11 // pred_check
          %p297 = pneg %p67
        $region14: #{tpu_custom_call.1} parent=11 // pred_check_branch
          %299 = sbr.rel (%p297) target = $region16
        $region15: #{tpu_custom_call.1} parent=11 // pred_region
          _
        $region16: #{tpu_custom_call.1} parent=11 // pred_fallthru
          _
        // Predicated region
        $region17: #{tpu_custom_call.1} parent=11 // pred_check
          %p300 = pneg %p88
        $region18: #{tpu_custom_call.1} parent=11 // pred_check_branch
          %302 = sbr.rel (%p300) target = $region20
        $region19: #{tpu_custom_call.1} parent=11 // pred_region
          _
        $region20: #{tpu_custom_call.1} parent=11 // pred_fallthru
          _
        // Predicated region
        $region21: #{tpu_custom_call.1} parent=11 // pred_check
          %p303 = pneg %p109
        $region22: #{tpu_custom_call.1} parent=11 // pred_check_branch
          %305 = sbr.rel (%p303) target = $region24
        $region23: #{tpu_custom_call.1} parent=11 // pred_region
          _
        $region24: #{tpu_custom_call.1} parent=11 // pred_fallthru
          _
        // Predicated region
        $region25: #{tpu_custom_call.1} parent=11 // pred_check
          %p306 = pneg %p130
        $region26: #{tpu_custom_call.1} parent=11 // pred_check_branch
          %308 = sbr.rel (%p306) target = $region28
        $region27: #{tpu_custom_call.1} parent=11 // pred_region
          _
        $region28: #{tpu_custom_call.1} parent=11 // pred_fallthru
          _
        // Predicated region
        $region29: #{tpu_custom_call.1} parent=11 // pred_check
          %p309 = pneg %p151
        $region30: #{tpu_custom_call.1} parent=11 // pred_check_branch
          %311 = sbr.rel (%p309) target = $region32
        $region31: #{tpu_custom_call.1} parent=11 // pred_region
          _
        $region32: #{tpu_custom_call.1} parent=11 // pred_fallthru
          _
        // Predicated region
        $region33: #{tpu_custom_call.1} parent=11 // pred_check
          %p312 = pneg %p172
        $region34: #{tpu_custom_call.1} parent=11 // pred_check_branch
          %314 = sbr.rel (%p312) target = $region36
        $region35: #{tpu_custom_call.1} parent=11 // pred_region
          _
        $region36: #{tpu_custom_call.1} parent=11 // pred_fallthru
          _
        // Predicated region
        $region37: #{tpu_custom_call.1} parent=11 // pred_check
          %p315 = pneg %p193
        $region38: #{tpu_custom_call.1} parent=11 // pred_check_branch
          %317 = sbr.rel (%p315) target = $region40
        $region39: #{tpu_custom_call.1} parent=11 // pred_region
          _
        $region40: #{tpu_custom_call.1} parent=11 // pred_fallthru
          _
        // Predicated region
        $region41: #{tpu_custom_call.1} parent=11 // pred_check
          %p318 = pneg %p214
        $region42: #{tpu_custom_call.1} parent=11 // pred_check_branch
          %320 = sbr.rel (%p318) target = $region44
        $region43: #{tpu_custom_call.1} parent=11 // pred_region
          _
        $region44: #{tpu_custom_call.1} parent=11 // pred_fallthru
          _
        // Predicated region
        $region45: #{tpu_custom_call.1} parent=11 // pred_check
          %p321 = pneg %p235
        $region46: #{tpu_custom_call.1} parent=11 // pred_check_branch
          %323 = sbr.rel (%p321) target = $region48
        $region47: #{tpu_custom_call.1} parent=11 // pred_region
          _
        $region48: #{tpu_custom_call.1} parent=11 // pred_fallthru
          _
        // Predicated region
        $region49: #{tpu_custom_call.1} parent=11 // pred_check
          %p324 = pneg %p256
        $region50: #{tpu_custom_call.1} parent=11 // pred_check_branch
          %326 = sbr.rel (%p324) target = $region52
        $region51: #{tpu_custom_call.1} parent=11 // pred_region
          _
        $region52: #{tpu_custom_call.1} parent=11 // pred_fallthru
          _
      $region12: #{tpu_custom_call.1} parent=5 // pred_fallthru
        _
      %p327 = scmp.lt.s32.totalorder %s20, 2
      // Predicated region
      $region53: #{tpu_custom_call.1} parent=5 // pred_check
        %p328 = pneg %p327
      $region54: #{tpu_custom_call.1} parent=5 // pred_check_branch
        %330 = sbr.rel (%p328) target = $region56
      $region55: #{tpu_custom_call.1} parent=5 // pred_region
        // Predicated region
        $region57: #{tpu_custom_call.1} parent=55 // pred_check
          %p331 = pneg %p40
        $region58: #{tpu_custom_call.1} parent=55 // pred_check_branch
          %333 = sbr.rel (%p331) target = $region60
        $region59: #{tpu_custom_call.1} parent=55 // pred_region
          %p334 = scmp.lt.s32.totalorder %s20, 1
          %s335 = scalar_select %p334, %s20, 1
          %s336 = smul.addr %s335, 8
          %s337 = scalar_lea.vmem %s0, %s336
        $region60: #{tpu_custom_call.1} parent=55 // pred_fallthru
          _
      $region56: #{tpu_custom_call.1} parent=5 // pred_fallthru
        _
      %p338 = scmp.le.s32.totalorder 1, %s20
      %p339 = scmp.lt.s32.totalorder %s20, 3
      %p340 = pnand %p338, %p339
      %p341 = pneg %p340
      // Predicated region
      $region61: #{tpu_custom_call.1} parent=5 // pred_check
        _
      $region62: #{tpu_custom_call.1} parent=5 // pred_check_branch
        %343 = sbr.rel (%p340) target = $region64
      $region63: #{tpu_custom_call.1} parent=5 // pred_region
        %s344 = ssub.s32 %s20, 1
        %p345 = scmp.lt.s32.totalorder %s25, 1
        %s346 = scalar_select %p345, %s25, 1
        %s347 = smul.addr %s346, 8
        %s348 = scalar_lea.vmem %s0, %s347
        %p349 = pneg %p46
        %p350 = pneg %p43
        %p351 = pneg %p67
        %p352 = pneg %p64
        %p353 = pneg %p88
        %p354 = pneg %p85
        %p355 = pneg %p109
        %p356 = pneg %p106
        %p357 = pneg %p130
        %p358 = pneg %p127
        %p359 = pneg %p151
        %p360 = pneg %p148
        %p361 = pneg %p172
        %p362 = pneg %p169
        %p363 = pneg %p193
        %p364 = pneg %p190
        %p365 = pneg %p214
        %p366 = pneg %p211
        %p367 = pneg %p235
        %p368 = pneg %p232
        %p369 = pneg %p256
        %p370 = pneg %p253
        %p371 = pneg %p282
        %p372 = pneg %p279
        %s373 = sand.u32 %s269, 1
        %s374 = scalar_lea.sflag [#allocation3], %s373
        %s375 = sand.u32 %s269, 1
        %s376 = smul.addr %s375, 8
        %s377 = scalar_lea.vmem [#allocation2], %s376
        %p378 = scmp.lt.s32.totalorder %s25, 1
        %s379 = scalar_select %p378, %s25, 1
        %s380 = smul.addr %s379, 8
        %s381 = scalar_lea.vmem %s0, %s380
        %v382 = vld [vmem:[%s381] sm:$0xff]
        %v383 = vld [vmem:[%s1] sm:$0xff]
        %v384 = vld [vmem:[%s1 + $0x8] sm:$0xff]
        %v385 = vld [vmem:[%s1 + $0x10] sm:$0xff]
        %v386 = vld [vmem:[%s1 + $0x18] sm:$0xff]
        %v387 = vld [vmem:[%s2] sm:$0x1]
        %v389 = vlaneseq
        %v390 = vshrl.u32 %v389, 7
        %v391 = vsub.s32 0, %v390
        %v392 = vrot.slane %v387, %v391
        %vm394 = vcmask 261120
        %v396 = vsel %vm394, %v382, 0
        %398 = vmatprep.subr.mxu0 0.0
        %399 = vmatpush1.msra.mxu0 %v383
        %400 = vmatprep.subr.mxu0 0.0
        %401 = vmatpush1.msra.mxu0 %v384
        %402 = vmatprep.subr.mxu0 0.0
        %403 = vmatpush1.msra.mxu0 %v385
        %404 = vmatprep.subr.mxu0 0.0
        %405 = vmatpush1.msra.mxu0 %v386
        %406 = vmatprep.subr.mxu0 0.0
        %407 = vmatpush1.msra.mxu0 0.0
        %408 = vmatprep.subr.mxu0 0.0
        %409 = vmatpush1.msra.mxu0 0.0
        %410 = vmatprep.subr.mxu0 0.0
        %411 = vmatpush1.msra.mxu0 0.0
        %412 = vmatprep.subr.mxu0 0.0
        %413 = vmatpush1.msra.mxu0 0.0
        %414 = vmatprep.subr.mxu0 0.0
        %415 = vmatpush1.msra.mxu0 0.0
        %416 = vmatprep.subr.mxu0 0.0
        %417 = vmatpush1.msra.mxu0 0.0
        %418 = vmatprep.subr.mxu0 0.0
        %419 = vmatpush1.msra.mxu0 0.0
        %420 = vmatprep.subr.mxu0 0.0
        %421 = vmatpush1.msra.mxu0 0.0
        %422 = vmatprep.subr.mxu0 0.0
        %423 = vmatpush1.msra.mxu0 0.0
        %424 = vmatprep.subr.mxu0 0.0
        %425 = vmatpush1.msra.mxu0 0.0
        %426 = vmatprep.subr.mxu0 0.0
        %427 = vmatpush1.msra.mxu0 0.0
        %428 = vmatprep.subr.mxu0 0.0
        %429 = vmatpush1.msra.mxu0 0.0
        %430 = vmatprep.subr.mxu0 0.0
        %431 = vmatpush1.msra.mxu0 0.0
        %432 = vmatprep.subr.mxu0 0.0
        %433 = vmatpush1.msra.mxu0 0.0
        %434 = vmatprep.subr.mxu0 0.0
        %435 = vmatpush1.msra.mxu0 0.0
        %436 = vmatprep.subr.mxu0 0.0
        %437 = vmatpush1.msra.mxu0 0.0
        %438 = vmatprep.subr.mxu0 0.0
        %439 = vmatpush1.msra.mxu0 0.0
        %440 = vmatprep.subr.mxu0 0.0
        %441 = vmatpush1.msra.mxu0 0.0
        %442 = vmatprep.subr.mxu0 0.0
        %443 = vmatpush1.msra.mxu0 0.0
        %444 = vmatprep.subr.mxu0 0.0
        %445 = vmatpush1.msra.mxu0 0.0
        %446 = vmatprep.subr.mxu0 0.0
        %447 = vmatpush1.msra.mxu0 0.0
        %448 = vmatprep.subr.mxu0 0.0
        %449 = vmatpush1.msra.mxu0 0.0
        %450 = vmatprep.subr.mxu0 0.0
        %451 = vmatpush1.msra.mxu0 0.0
        %452 = vmatprep.subr.mxu0 0.0
        %453 = vmatpush1.msra.mxu0 0.0
        %454 = vmatprep.subr.mxu0 0.0
        %455 = vmatpush1.msra.mxu0 0.0
        %456 = vmatprep.subr.mxu0 0.0
        %457 = vmatpush1.msra.mxu0 0.0
        %458 = vmatprep.subr.mxu0 0.0
        %459 = vmatpush1.msra.mxu0 0.0
        %460 = vmatprep.subr.mxu0 0.0
        %461 = vmatpush1.msra.mxu0 0.0
        %462 = vmatprep.mubr.f32.mxu0 0.0
        %463 = vmatmul.mubr.f32.gmra.mrb[0].mxu0 %v396
        %v464 = vpop.f32.mrb[0].mxu0
        %v465 = vadd.f32 %v392, %v464
        %v466 = vpop.f32.mrb[0].mxu0
        %467 = vdwg.mxu0
        %v468 = vld [vmem:[%s3] sm:$0xff]
        %v469 = vld [vmem:[%s3 + $0x8] sm:$0xff]
        %v470 = vld [vmem:[%s3 + $0x10] sm:$0xff]
        %v471 = vld [vmem:[%s3 + $0x18] sm:$0xff]
        %v472 = vld [vmem:[%s4] sm:$0x1]
        %v474 = vlaneseq
        %v475 = vshrl.u32 %v474, 7
        %v476 = vsub.s32 0, %v475
        %v477 = vrot.slane %v472, %v476
        %479 = vmatprep.subr.mxu0 0.0
        %480 = vmatpush1.msra.mxu0 %v468
        %481 = vmatprep.subr.mxu0 0.0
        %482 = vmatpush1.msra.mxu0 %v469
        %483 = vmatprep.subr.mxu0 0.0
        %484 = vmatpush1.msra.mxu0 %v470
        %485 = vmatprep.subr.mxu0 0.0
        %486 = vmatpush1.msra.mxu0 %v471
        %487 = vmatprep.subr.mxu0 0.0
        %488 = vmatpush1.msra.mxu0 0.0
        %489 = vmatprep.subr.mxu0 0.0
        %490 = vmatpush1.msra.mxu0 0.0
        %491 = vmatprep.subr.mxu0 0.0
        %492 = vmatpush1.msra.mxu0 0.0
        %493 = vmatprep.subr.mxu0 0.0
        %494 = vmatpush1.msra.mxu0 0.0
        %495 = vmatprep.subr.mxu0 0.0
        %496 = vmatpush1.msra.mxu0 0.0
        %497 = vmatprep.subr.mxu0 0.0
        %498 = vmatpush1.msra.mxu0 0.0
        %499 = vmatprep.subr.mxu0 0.0
        %500 = vmatpush1.msra.mxu0 0.0
        %501 = vmatprep.subr.mxu0 0.0
        %502 = vmatpush1.msra.mxu0 0.0
        %503 = vmatprep.subr.mxu0 0.0
        %504 = vmatpush1.msra.mxu0 0.0
        %505 = vmatprep.subr.mxu0 0.0
        %506 = vmatpush1.msra.mxu0 0.0
        %507 = vmatprep.subr.mxu0 0.0
        %508 = vmatpush1.msra.mxu0 0.0
        %509 = vmatprep.subr.mxu0 0.0
        %510 = vmatpush1.msra.mxu0 0.0
        %511 = vmatprep.subr.mxu0 0.0
        %512 = vmatpush1.msra.mxu0 0.0
        %513 = vmatprep.subr.mxu0 0.0
        %514 = vmatpush1.msra.mxu0 0.0
        %515 = vmatprep.subr.mxu0 0.0
        %516 = vmatpush1.msra.mxu0 0.0
        %517 = vmatprep.subr.mxu0 0.0
        %518 = vmatpush1.msra.mxu0 0.0
        %519 = vmatprep.subr.mxu0 0.0
        %520 = vmatpush1.msra.mxu0 0.0
        %521 = vmatprep.subr.mxu0 0.0
        %522 = vmatpush1.msra.mxu0 0.0
        %523 = vmatprep.subr.mxu0 0.0
        %524 = vmatpush1.msra.mxu0 0.0
        %525 = vmatprep.subr.mxu0 0.0
        %526 = vmatpush1.msra.mxu0 0.0
        %527 = vmatprep.subr.mxu0 0.0
        %528 = vmatpush1.msra.mxu0 0.0
        %529 = vmatprep.subr.mxu0 0.0
        %530 = vmatpush1.msra.mxu0 0.0
        %531 = vmatprep.subr.mxu0 0.0
        %532 = vmatpush1.msra.mxu0 0.0
        %533 = vmatprep.subr.mxu0 0.0
        %534 = vmatpush1.msra.mxu0 0.0
        %535 = vmatprep.subr.mxu0 0.0
        %536 = vmatpush1.msra.mxu0 0.0
        %537 = vmatprep.subr.mxu0 0.0
        %538 = vmatpush1.msra.mxu0 0.0
        %539 = vmatprep.subr.mxu0 0.0
        %540 = vmatpush1.msra.mxu0 0.0
        %541 = vmatprep.subr.mxu0 0.0
        %542 = vmatpush1.msra.mxu0 0.0
        %543 = vmatprep.mubr.f32.mxu0 0.0
        %544 = vmatmul.mubr.f32.gmra.mrb[0].mxu0 %v396
        %v545 = vpop.f32.mrb[0].mxu0
        %v546 = vadd.f32 %v477, %v545
        %v547 = vpop.f32.mrb[0].mxu0
        %548 = vdwg.mxu0
        %v549 = vld [vmem:[%s5] sm:$0xff]
        %v550 = vld [vmem:[%s5 + $0x8] sm:$0xff]
        %v551 = vld [vmem:[%s5 + $0x10] sm:$0xff]
        %v552 = vld [vmem:[%s5 + $0x18] sm:$0xff]
        %v553 = vld [vmem:[%s6] sm:$0x1]
        %v555 = vlaneseq
        %v556 = vshrl.u32 %v555, 7
        %v557 = vsub.s32 0, %v556
        %v558 = vrot.slane %v553, %v557
        %560 = vmatprep.subr.mxu0 0.0
        %561 = vmatpush1.msra.mxu0 %v549
        %562 = vmatprep.subr.mxu0 0.0
        %563 = vmatpush1.msra.mxu0 %v550
        %564 = vmatprep.subr.mxu0 0.0
        %565 = vmatpush1.msra.mxu0 %v551
        %566 = vmatprep.subr.mxu0 0.0
        %567 = vmatpush1.msra.mxu0 %v552
        %568 = vmatprep.subr.mxu0 0.0
        %569 = vmatpush1.msra.mxu0 0.0
        %570 = vmatprep.subr.mxu0 0.0
        %571 = vmatpush1.msra.mxu0 0.0
        %572 = vmatprep.subr.mxu0 0.0
        %573 = vmatpush1.msra.mxu0 0.0
        %574 = vmatprep.subr.mxu0 0.0
        %575 = vmatpush1.msra.mxu0 0.0
        %576 = vmatprep.subr.mxu0 0.0
        %577 = vmatpush1.msra.mxu0 0.0
        %578 = vmatprep.subr.mxu0 0.0
        %579 = vmatpush1.msra.mxu0 0.0
        %580 = vmatprep.subr.mxu0 0.0
        %581 = vmatpush1.msra.mxu0 0.0
        %582 = vmatprep.subr.mxu0 0.0
        %583 = vmatpush1.msra.mxu0 0.0
        %584 = vmatprep.subr.mxu0 0.0
        %585 = vmatpush1.msra.mxu0 0.0
        %586 = vmatprep.subr.mxu0 0.0
        %587 = vmatpush1.msra.mxu0 0.0
        %588 = vmatprep.subr.mxu0 0.0
        %589 = vmatpush1.msra.mxu0 0.0
        %590 = vmatprep.subr.mxu0 0.0
        %591 = vmatpush1.msra.mxu0 0.0
        %592 = vmatprep.subr.mxu0 0.0
        %593 = vmatpush1.msra.mxu0 0.0
        %594 = vmatprep.subr.mxu0 0.0
        %595 = vmatpush1.msra.mxu0 0.0
        %596 = vmatprep.subr.mxu0 0.0
        %597 = vmatpush1.msra.mxu0 0.0
        %598 = vmatprep.subr.mxu0 0.0
        %599 = vmatpush1.msra.mxu0 0.0
        %600 = vmatprep.subr.mxu0 0.0
        %601 = vmatpush1.msra.mxu0 0.0
        %602 = vmatprep.subr.mxu0 0.0
        %603 = vmatpush1.msra.mxu0 0.0
        %604 = vmatprep.subr.mxu0 0.0
        %605 = vmatpush1.msra.mxu0 0.0
        %606 = vmatprep.subr.mxu0 0.0
        %607 = vmatpush1.msra.mxu0 0.0
        %608 = vmatprep.subr.mxu0 0.0
        %609 = vmatpush1.msra.mxu0 0.0
        %610 = vmatprep.subr.mxu0 0.0
        %611 = vmatpush1.msra.mxu0 0.0
        %612 = vmatprep.subr.mxu0 0.0
        %613 = vmatpush1.msra.mxu0 0.0
        %614 = vmatprep.subr.mxu0 0.0
        %615 = vmatpush1.msra.mxu0 0.0
        %616 = vmatprep.subr.mxu0 0.0
        %617 = vmatpush1.msra.mxu0 0.0
        %618 = vmatprep.subr.mxu0 0.0
        %619 = vmatpush1.msra.mxu0 0.0
        %620 = vmatprep.subr.mxu0 0.0
        %621 = vmatpush1.msra.mxu0 0.0
        %622 = vmatprep.subr.mxu0 0.0
        %623 = vmatpush1.msra.mxu0 0.0
        %624 = vmatprep.mubr.f32.mxu0 0.0
        %625 = vmatmul.mubr.f32.gmra.mrb[0].mxu0 %v396
        %v626 = vpop.f32.mrb[0].mxu0
        %v627 = vadd.f32 %v558, %v626
        %v628 = vpop.f32.mrb[0].mxu0
        %629 = vdwg.mxu0
        %v630 = vld [vmem:[%s7] sm:$0xff]
        %v631 = vld [vmem:[%s7 + $0x8] sm:$0xff]
        %v632 = vld [vmem:[%s7 + $0x10] sm:$0xff]
        %v633 = vld [vmem:[%s7 + $0x18] sm:$0xff]
        %v634 = vld [vmem:[%s7 + $0x20] sm:$0xff]
        %v635 = vld [vmem:[%s7 + $0x28] sm:$0xff]
        %v636 = vld [vmem:[%s7 + $0x30] sm:$0xff]
        %v637 = vld [vmem:[%s7 + $0x38] sm:$0xff]
        %v638 = vld [vmem:[%s7 + $0x40] sm:$0xff]
        %v639 = vld [vmem:[%s7 + $0x48] sm:$0xff]
        %v640 = vld [vmem:[%s7 + $0x50] sm:$0xff]
        %v641 = vld [vmem:[%s7 + $0x58] sm:$0xff]
        %v642 = vld [vmem:[%s7 + $0x60] sm:$0xff]
        %v643 = vld [vmem:[%s7 + $0x68] sm:$0xff]
        %v644 = vld [vmem:[%s7 + $0x70] sm:$0xff]
        %v645 = vld [vmem:[%s7 + $0x78] sm:$0xff]
        %v647 = vsel %vm394, %v465, 0
        %v650 = vsel %vm394, %v546, 0
        %652 = vmatprep.subr.mxu0 0.0
        %653 = vmatpush1.xpose.msra.mxu0 %v650
        %654 = vmatprep.subr.mxu0 0.0
        %655 = vmatpush1.xpose.msra.mxu0 0.0
        %656 = vmatprep.subr.mxu0 0.0
        %657 = vmatpush1.xpose.msra.mxu0 0.0
        %658 = vmatprep.subr.mxu0 0.0
        %659 = vmatpush1.xpose.msra.mxu0 0.0
        %660 = vmatprep.subr.mxu0 0.0
        %661 = vmatpush1.xpose.msra.mxu0 0.0
        %662 = vmatprep.subr.mxu0 0.0
        %663 = vmatpush1.xpose.msra.mxu0 0.0
        %664 = vmatprep.subr.mxu0 0.0
        %665 = vmatpush1.xpose.msra.mxu0 0.0
        %666 = vmatprep.subr.mxu0 0.0
        %667 = vmatpush1.xpose.msra.mxu0 0.0
        %668 = vmatprep.subr.mxu0 0.0
        %669 = vmatpush1.xpose.msra.mxu0 0.0
        %670 = vmatprep.subr.mxu0 0.0
        %671 = vmatpush1.xpose.msra.mxu0 0.0
        %672 = vmatprep.subr.mxu0 0.0
        %673 = vmatpush1.xpose.msra.mxu0 0.0
        %674 = vmatprep.subr.mxu0 0.0
        %675 = vmatpush1.xpose.msra.mxu0 0.0
        %676 = vmatprep.subr.mxu0 0.0
        %677 = vmatpush1.xpose.msra.mxu0 0.0
        %678 = vmatprep.subr.mxu0 0.0
        %679 = vmatpush1.xpose.msra.mxu0 0.0
        %680 = vmatprep.subr.mxu0 0.0
        %681 = vmatpush1.xpose.msra.mxu0 0.0
        %682 = vmatprep.subr.mxu0 0.0
        %683 = vmatpush1.xpose.msra.mxu0 0.0
        %684 = vmatprep.subr.mxu0 0.0
        %685 = vmatpush1.xpose.msra.mxu0 0.0
        %686 = vmatprep.subr.mxu0 0.0
        %687 = vmatpush1.xpose.msra.mxu0 0.0
        %688 = vmatprep.subr.mxu0 0.0
        %689 = vmatpush1.xpose.msra.mxu0 0.0
        %690 = vmatprep.subr.mxu0 0.0
        %691 = vmatpush1.xpose.msra.mxu0 0.0
        %692 = vmatprep.subr.mxu0 0.0
        %693 = vmatpush1.xpose.msra.mxu0 0.0
        %694 = vmatprep.subr.mxu0 0.0
        %695 = vmatpush1.xpose.msra.mxu0 0.0
        %696 = vmatprep.subr.mxu0 0.0
        %697 = vmatpush1.xpose.msra.mxu0 0.0
        %698 = vmatprep.subr.mxu0 0.0
        %699 = vmatpush1.xpose.msra.mxu0 0.0
        %700 = vmatprep.subr.mxu0 0.0
        %701 = vmatpush1.xpose.msra.mxu0 0.0
        %702 = vmatprep.subr.mxu0 0.0
        %703 = vmatpush1.xpose.msra.mxu0 0.0
        %704 = vmatprep.subr.mxu0 0.0
        %705 = vmatpush1.xpose.msra.mxu0 0.0
        %706 = vmatprep.subr.mxu0 0.0
        %707 = vmatpush1.xpose.msra.mxu0 0.0
        %708 = vmatprep.subr.mxu0 0.0
        %709 = vmatpush1.xpose.msra.mxu0 0.0
        %710 = vmatprep.subr.mxu0 0.0
        %711 = vmatpush1.xpose.msra.mxu0 0.0
        %712 = vmatprep.subr.mxu0 0.0
        %713 = vmatpush1.xpose.msra.mxu0 0.0
        %714 = vmatprep.subr.mxu0 0.0
        %715 = vmatpush1.xpose.msra.mxu0 0.0
        %716 = vmatprep.mubr.f32.mxu0 0.0
        %717 = vmatmul.mubr.f32.gmra.mrb[0].mxu0 %v647
        %v718 = vpop.f32.mrb[0].mxu0
        %v719 = vadd.f32 0.0, %v718
        %v720 = vpop.f32.mrb[0].mxu0
        %721 = vdwg.mxu0
        %v722 = vmul.f32 %v719, 0.17677669
        %vm723 = vcmask 64512
        %v724 = vsel %vm723, %v722, -inf
        %725 = vmax.xlane.f32.xlu0 %v724
        %v726 = vpop.xlane.xlu0 %725
        %v727 = vsub.f32 %v722, %v726
        %v728 = vmul.f32 %v727, 1.442695
        %v729 = vpow.pop %v728
        %v730 = vsel %vm723, %v729, 0.0
        %731 = vadd.xlane.f32.xlu0 %v730
        %v732 = vpop.xlane.xlu0 %731
        %v733 = vrcp.pop %v732
        %v734 = vmul.f32 %v729, %v733
        %v736 = vsel %vm723, %v734, 0
        %738 = vmatprep.subr.mxu0 0.0
        %739 = vmatpush1.msra.mxu0 %v627
        %740 = vmatprep.subr.mxu0 0.0
        %741 = vmatpush1.msra.mxu0 0.0
        %742 = vmatprep.subr.mxu0 0.0
        %743 = vmatpush1.msra.mxu0 0.0
        %744 = vmatprep.subr.mxu0 0.0
        %745 = vmatpush1.msra.mxu0 0.0
        %746 = vmatprep.subr.mxu0 0.0
        %747 = vmatpush1.msra.mxu0 0.0
        %748 = vmatprep.subr.mxu0 0.0
        %749 = vmatpush1.msra.mxu0 0.0
        %750 = vmatprep.subr.mxu0 0.0
        %751 = vmatpush1.msra.mxu0 0.0
        %752 = vmatprep.subr.mxu0 0.0
        %753 = vmatpush1.msra.mxu0 0.0
        %754 = vmatprep.subr.mxu0 0.0
        %755 = vmatpush1.msra.mxu0 0.0
        %756 = vmatprep.subr.mxu0 0.0
        %757 = vmatpush1.msra.mxu0 0.0
        %758 = vmatprep.subr.mxu0 0.0
        %759 = vmatpush1.msra.mxu0 0.0
        %760 = vmatprep.subr.mxu0 0.0
        %761 = vmatpush1.msra.mxu0 0.0
        %762 = vmatprep.subr.mxu0 0.0
        %763 = vmatpush1.msra.mxu0 0.0
        %764 = vmatprep.subr.mxu0 0.0
        %765 = vmatpush1.msra.mxu0 0.0
        %766 = vmatprep.subr.mxu0 0.0
        %767 = vmatpush1.msra.mxu0 0.0
        %768 = vmatprep.subr.mxu0 0.0
        %769 = vmatpush1.msra.mxu0 0.0
        %770 = vmatprep.subr.mxu0 0.0
        %771 = vmatpush1.msra.mxu0 0.0
        %772 = vmatprep.subr.mxu0 0.0
        %773 = vmatpush1.msra.mxu0 0.0
        %774 = vmatprep.subr.mxu0 0.0
        %775 = vmatpush1.msra.mxu0 0.0
        %776 = vmatprep.subr.mxu0 0.0
        %777 = vmatpush1.msra.mxu0 0.0
        %778 = vmatprep.subr.mxu0 0.0
        %779 = vmatpush1.msra.mxu0 0.0
        %780 = vmatprep.subr.mxu0 0.0
        %781 = vmatpush1.msra.mxu0 0.0
        %782 = vmatprep.subr.mxu0 0.0
        %783 = vmatpush1.msra.mxu0 0.0
        %784 = vmatprep.subr.mxu0 0.0
        %785 = vmatpush1.msra.mxu0 0.0
        %786 = vmatprep.subr.mxu0 0.0
        %787 = vmatpush1.msra.mxu0 0.0
        %788 = vmatprep.subr.mxu0 0.0
        %789 = vmatpush1.msra.mxu0 0.0
        %790 = vmatprep.subr.mxu0 0.0
        %791 = vmatpush1.msra.mxu0 0.0
        %792 = vmatprep.subr.mxu0 0.0
        %793 = vmatpush1.msra.mxu0 0.0
        %794 = vmatprep.subr.mxu0 0.0
        %795 = vmatpush1.msra.mxu0 0.0
        %796 = vmatprep.subr.mxu0 0.0
        %797 = vmatpush1.msra.mxu0 0.0
        %798 = vmatprep.subr.mxu0 0.0
        %799 = vmatpush1.msra.mxu0 0.0
        %800 = vmatprep.subr.mxu0 0.0
        %801 = vmatpush1.msra.mxu0 0.0
        %802 = vmatprep.mubr.f32.mxu0 0.0
        %803 = vmatmul.mubr.f32.gmra.mrb[0].mxu0 %v736
        %v804 = vpop.f32.mrb[0].mxu0
        %v805 = vadd.f32 0.0, %v804
        %v806 = vpop.f32.mrb[0].mxu0
        %807 = vdwg.mxu0
        %808 = vrot.lane.b32.xlu0 %v465, 96
        %v809 = vpop.permute.xlu0 %808
        %810 = vrot.lane.b32.xlu0 %v546, 96
        %v811 = vpop.permute.xlu0 %810
        %v812 = vsel %vm394, %v809, 0
        %v814 = vsel %vm394, %v811, 0
        %816 = vmatprep.subr.mxu0 0.0
        %817 = vmatpush1.xpose.msra.mxu0 %v814
        %818 = vmatprep.subr.mxu0 0.0
        %819 = vmatpush1.xpose.msra.mxu0 0.0
        %820 = vmatprep.subr.mxu0 0.0
        %821 = vmatpush1.xpose.msra.mxu0 0.0
        %822 = vmatprep.subr.mxu0 0.0
        %823 = vmatpush1.xpose.msra.mxu0 0.0
        %824 = vmatprep.subr.mxu0 0.0
        %825 = vmatpush1.xpose.msra.mxu0 0.0
        %826 = vmatprep.subr.mxu0 0.0
        %827 = vmatpush1.xpose.msra.mxu0 0.0
        %828 = vmatprep.subr.mxu0 0.0
        %829 = vmatpush1.xpose.msra.mxu0 0.0
        %830 = vmatprep.subr.mxu0 0.0
        %831 = vmatpush1.xpose.msra.mxu0 0.0
        %832 = vmatprep.subr.mxu0 0.0
        %833 = vmatpush1.xpose.msra.mxu0 0.0
        %834 = vmatprep.subr.mxu0 0.0
        %835 = vmatpush1.xpose.msra.mxu0 0.0
        %836 = vmatprep.subr.mxu0 0.0
        %837 = vmatpush1.xpose.msra.mxu0 0.0
        %838 = vmatprep.subr.mxu0 0.0
        %839 = vmatpush1.xpose.msra.mxu0 0.0
        %840 = vmatprep.subr.mxu0 0.0
        %841 = vmatpush1.xpose.msra.mxu0 0.0
        %842 = vmatprep.subr.mxu0 0.0
        %843 = vmatpush1.xpose.msra.mxu0 0.0
        %844 = vmatprep.subr.mxu0 0.0
        %845 = vmatpush1.xpose.msra.mxu0 0.0
        %846 = vmatprep.subr.mxu0 0.0
        %847 = vmatpush1.xpose.msra.mxu0 0.0
        %848 = vmatprep.subr.mxu0 0.0
        %849 = vmatpush1.xpose.msra.mxu0 0.0
        %850 = vmatprep.subr.mxu0 0.0
        %851 = vmatpush1.xpose.msra.mxu0 0.0
        %852 = vmatprep.subr.mxu0 0.0
        %853 = vmatpush1.xpose.msra.mxu0 0.0
        %854 = vmatprep.subr.mxu0 0.0
        %855 = vmatpush1.xpose.msra.mxu0 0.0
        %856 = vmatprep.subr.mxu0 0.0
        %857 = vmatpush1.xpose.msra.mxu0 0.0
        %858 = vmatprep.subr.mxu0 0.0
        %859 = vmatpush1.xpose.msra.mxu0 0.0
        %860 = vmatprep.subr.mxu0 0.0
        %861 = vmatpush1.xpose.msra.mxu0 0.0
        %862 = vmatprep.subr.mxu0 0.0
        %863 = vmatpush1.xpose.msra.mxu0 0.0
        %864 = vmatprep.subr.mxu0 0.0
        %865 = vmatpush1.xpose.msra.mxu0 0.0
        %866 = vmatprep.subr.mxu0 0.0
        %867 = vmatpush1.xpose.msra.mxu0 0.0
        %868 = vmatprep.subr.mxu0 0.0
        %869 = vmatpush1.xpose.msra.mxu0 0.0
        %870 = vmatprep.subr.mxu0 0.0
        %871 = vmatpush1.xpose.msra.mxu0 0.0
        %872 = vmatprep.subr.mxu0 0.0
        %873 = vmatpush1.xpose.msra.mxu0 0.0
        %874 = vmatprep.subr.mxu0 0.0
        %875 = vmatpush1.xpose.msra.mxu0 0.0
        %876 = vmatprep.subr.mxu0 0.0
        %877 = vmatpush1.xpose.msra.mxu0 0.0
        %878 = vmatprep.subr.mxu0 0.0
        %879 = vmatpush1.xpose.msra.mxu0 0.0
        %880 = vmatprep.mubr.f32.mxu0 0.0
        %881 = vmatmul.mubr.f32.gmra.mrb[0].mxu0 %v812
        %v882 = vpop.f32.mrb[0].mxu0
        %v883 = vadd.f32 0.0, %v882
        %v884 = vpop.f32.mrb[0].mxu0
        %885 = vdwg.mxu0
        %v886 = vmul.f32 %v883, 0.17677669
        %v887 = vsel %vm723, %v886, -inf
        %888 = vmax.xlane.f32.xlu0 %v887
        %v889 = vpop.xlane.xlu0 %888
        %v890 = vsub.f32 %v886, %v889
        %v891 = vmul.f32 %v890, 1.442695
        %v892 = vpow.pop %v891
        %v893 = vsel %vm723, %v892, 0.0
        %894 = vadd.xlane.f32.xlu0 %v893
        %v895 = vpop.xlane.xlu0 %894
        %v896 = vrcp.pop %v895
        %v897 = vmul.f32 %v892, %v896
        %899 = vrot.lane.b32.xlu0 %v627, 96
        %v900 = vpop.permute.xlu0 %899
        %v903 = vsel %vm723, %v897, 0
        %905 = vmatprep.subr.mxu0 0.0
        %906 = vmatpush1.msra.mxu0 %v900
        %907 = vmatprep.subr.mxu0 0.0
        %908 = vmatpush1.msra.mxu0 0.0
        %909 = vmatprep.subr.mxu0 0.0
        %910 = vmatpush1.msra.mxu0 0.0
        %911 = vmatprep.subr.mxu0 0.0
        %912 = vmatpush1.msra.mxu0 0.0
        %913 = vmatprep.subr.mxu0 0.0
        %914 = vmatpush1.msra.mxu0 0.0
        %915 = vmatprep.subr.mxu0 0.0
        %916 = vmatpush1.msra.mxu0 0.0
        %917 = vmatprep.subr.mxu0 0.0
        %918 = vmatpush1.msra.mxu0 0.0
        %919 = vmatprep.subr.mxu0 0.0
        %920 = vmatpush1.msra.mxu0 0.0
        %921 = vmatprep.subr.mxu0 0.0
        %922 = vmatpush1.msra.mxu0 0.0
        %923 = vmatprep.subr.mxu0 0.0
        %924 = vmatpush1.msra.mxu0 0.0
        %925 = vmatprep.subr.mxu0 0.0
        %926 = vmatpush1.msra.mxu0 0.0
        %927 = vmatprep.subr.mxu0 0.0
        %928 = vmatpush1.msra.mxu0 0.0
        %929 = vmatprep.subr.mxu0 0.0
        %930 = vmatpush1.msra.mxu0 0.0
        %931 = vmatprep.subr.mxu0 0.0
        %932 = vmatpush1.msra.mxu0 0.0
        %933 = vmatprep.subr.mxu0 0.0
        %934 = vmatpush1.msra.mxu0 0.0
        %935 = vmatprep.subr.mxu0 0.0
        %936 = vmatpush1.msra.mxu0 0.0
        %937 = vmatprep.subr.mxu0 0.0
        %938 = vmatpush1.msra.mxu0 0.0
        %939 = vmatprep.subr.mxu0 0.0
        %940 = vmatpush1.msra.mxu0 0.0
        %941 = vmatprep.subr.mxu0 0.0
        %942 = vmatpush1.msra.mxu0 0.0
        %943 = vmatprep.subr.mxu0 0.0
        %944 = vmatpush1.msra.mxu0 0.0
        %945 = vmatprep.subr.mxu0 0.0
        %946 = vmatpush1.msra.mxu0 0.0
        %947 = vmatprep.subr.mxu0 0.0
        %948 = vmatpush1.msra.mxu0 0.0
        %949 = vmatprep.subr.mxu0 0.0
        %950 = vmatpush1.msra.mxu0 0.0
        %951 = vmatprep.subr.mxu0 0.0
        %952 = vmatpush1.msra.mxu0 0.0
        %953 = vmatprep.subr.mxu0 0.0
        %954 = vmatpush1.msra.mxu0 0.0
        %955 = vmatprep.subr.mxu0 0.0
        %956 = vmatpush1.msra.mxu0 0.0
        %957 = vmatprep.subr.mxu0 0.0
        %958 = vmatpush1.msra.mxu0 0.0
        %959 = vmatprep.subr.mxu0 0.0
        %960 = vmatpush1.msra.mxu0 0.0
        %961 = vmatprep.subr.mxu0 0.0
        %962 = vmatpush1.msra.mxu0 0.0
        %963 = vmatprep.subr.mxu0 0.0
        %964 = vmatpush1.msra.mxu0 0.0
        %965 = vmatprep.subr.mxu0 0.0
        %966 = vmatpush1.msra.mxu0 0.0
        %967 = vmatprep.subr.mxu0 0.0
        %968 = vmatpush1.msra.mxu0 0.0
        %969 = vmatprep.mubr.f32.mxu0 0.0
        %970 = vmatmul.mubr.f32.gmra.mrb[0].mxu0 %v903
        %v971 = vpop.f32.mrb[0].mxu0
        %v972 = vadd.f32 0.0, %v971
        %v973 = vpop.f32.mrb[0].mxu0
        %974 = vdwg.mxu0
        %v976 = vsel %vm394, %v972, 0
        %978 = vmatprep.subr.mxu0 0.0
        %979 = vmatpush1.msra.mxu0 %v634
        %980 = vmatprep.subr.mxu0 0.0
        %981 = vmatpush1.msra.mxu0 %v635
        %982 = vmatprep.subr.mxu0 0.0
        %983 = vmatpush1.msra.mxu0 %v636
        %984 = vmatprep.subr.mxu0 0.0
        %985 = vmatpush1.msra.mxu0 %v637
        %986 = vmatprep.subr.mxu0 0.0
        %987 = vmatpush1.msra.mxu0 0.0
        %988 = vmatprep.subr.mxu0 0.0
        %989 = vmatpush1.msra.mxu0 0.0
        %990 = vmatprep.subr.mxu0 0.0
        %991 = vmatpush1.msra.mxu0 0.0
        %992 = vmatprep.subr.mxu0 0.0
        %993 = vmatpush1.msra.mxu0 0.0
        %994 = vmatprep.subr.mxu0 0.0
        %995 = vmatpush1.msra.mxu0 0.0
        %996 = vmatprep.subr.mxu0 0.0
        %997 = vmatpush1.msra.mxu0 0.0
        %998 = vmatprep.subr.mxu0 0.0
        %999 = vmatpush1.msra.mxu0 0.0
        %1000 = vmatprep.subr.mxu0 0.0
        %1001 = vmatpush1.msra.mxu0 0.0
        %1002 = vmatprep.subr.mxu0 0.0
        %1003 = vmatpush1.msra.mxu0 0.0
        %1004 = vmatprep.subr.mxu0 0.0
        %1005 = vmatpush1.msra.mxu0 0.0
        %1006 = vmatprep.subr.mxu0 0.0
        %1007 = vmatpush1.msra.mxu0 0.0
        %1008 = vmatprep.subr.mxu0 0.0
        %1009 = vmatpush1.msra.mxu0 0.0
        %1010 = vmatprep.subr.mxu0 0.0
        %1011 = vmatpush1.msra.mxu0 0.0
        %1012 = vmatprep.subr.mxu0 0.0
        %1013 = vmatpush1.msra.mxu0 0.0
        %1014 = vmatprep.subr.mxu0 0.0
        %1015 = vmatpush1.msra.mxu0 0.0
        %1016 = vmatprep.subr.mxu0 0.0
        %1017 = vmatpush1.msra.mxu0 0.0
        %1018 = vmatprep.subr.mxu0 0.0
        %1019 = vmatpush1.msra.mxu0 0.0
        %1020 = vmatprep.subr.mxu0 0.0
        %1021 = vmatpush1.msra.mxu0 0.0
        %1022 = vmatprep.subr.mxu0 0.0
        %1023 = vmatpush1.msra.mxu0 0.0
        %1024 = vmatprep.subr.mxu0 0.0
        %1025 = vmatpush1.msra.mxu0 0.0
        %1026 = vmatprep.subr.mxu0 0.0
        %1027 = vmatpush1.msra.mxu0 0.0
        %1028 = vmatprep.subr.mxu0 0.0
        %1029 = vmatpush1.msra.mxu0 0.0
        %1030 = vmatprep.subr.mxu0 0.0
        %1031 = vmatpush1.msra.mxu0 0.0
        %1032 = vmatprep.subr.mxu0 0.0
        %1033 = vmatpush1.msra.mxu0 0.0
        %1034 = vmatprep.subr.mxu0 0.0
        %1035 = vmatpush1.msra.mxu0 0.0
        %1036 = vmatprep.subr.mxu0 0.0
        %1037 = vmatpush1.msra.mxu0 0.0
        %1038 = vmatprep.subr.mxu0 0.0
        %1039 = vmatpush1.msra.mxu0 0.0
        %1040 = vmatprep.subr.mxu0 0.0
        %1041 = vmatpush1.msra.mxu0 0.0
        %1042 = vmatprep.mubr.f32.mxu0 0.0
        %1043 = vmatmul.mubr.f32.gmra.mrb[0].mxu0 %v976
        %v1044 = vpop.f32.mrb[0].mxu0
        %v1045 = vadd.f32 0.0, %v1044
        %v1046 = vpop.f32.mrb[0].mxu0
        %1047 = vdwg.mxu0
        %v1049 = vsel %vm394, %v805, 0
        %1051 = vmatprep.subr.mxu0 0.0
        %1052 = vmatpush1.msra.mxu0 %v630
        %1053 = vmatprep.subr.mxu0 0.0
        %1054 = vmatpush1.msra.mxu0 %v631
        %1055 = vmatprep.subr.mxu0 0.0
        %1056 = vmatpush1.msra.mxu0 %v632
        %1057 = vmatprep.subr.mxu0 0.0
        %1058 = vmatpush1.msra.mxu0 %v633
        %1059 = vmatprep.subr.mxu0 0.0
        %1060 = vmatpush1.msra.mxu0 0.0
        %1061 = vmatprep.subr.mxu0 0.0
        %1062 = vmatpush1.msra.mxu0 0.0
        %1063 = vmatprep.subr.mxu0 0.0
        %1064 = vmatpush1.msra.mxu0 0.0
        %1065 = vmatprep.subr.mxu0 0.0
        %1066 = vmatpush1.msra.mxu0 0.0
        %1067 = vmatprep.subr.mxu0 0.0
        %1068 = vmatpush1.msra.mxu0 0.0
        %1069 = vmatprep.subr.mxu0 0.0
        %1070 = vmatpush1.msra.mxu0 0.0
        %1071 = vmatprep.subr.mxu0 0.0
        %1072 = vmatpush1.msra.mxu0 0.0
        %1073 = vmatprep.subr.mxu0 0.0
        %1074 = vmatpush1.msra.mxu0 0.0
        %1075 = vmatprep.subr.mxu0 0.0
        %1076 = vmatpush1.msra.mxu0 0.0
        %1077 = vmatprep.subr.mxu0 0.0
        %1078 = vmatpush1.msra.mxu0 0.0
        %1079 = vmatprep.subr.mxu0 0.0
        %1080 = vmatpush1.msra.mxu0 0.0
        %1081 = vmatprep.subr.mxu0 0.0
        %1082 = vmatpush1.msra.mxu0 0.0
        %1083 = vmatprep.subr.mxu0 0.0
        %1084 = vmatpush1.msra.mxu0 0.0
        %1085 = vmatprep.subr.mxu0 0.0
        %1086 = vmatpush1.msra.mxu0 0.0
        %1087 = vmatprep.subr.mxu0 0.0
        %1088 = vmatpush1.msra.mxu0 0.0
        %1089 = vmatprep.subr.mxu0 0.0
        %1090 = vmatpush1.msra.mxu0 0.0
        %1091 = vmatprep.subr.mxu0 0.0
        %1092 = vmatpush1.msra.mxu0 0.0
        %1093 = vmatprep.subr.mxu0 0.0
        %1094 = vmatpush1.msra.mxu0 0.0
        %1095 = vmatprep.subr.mxu0 0.0
        %1096 = vmatpush1.msra.mxu0 0.0
        %1097 = vmatprep.subr.mxu0 0.0
        %1098 = vmatpush1.msra.mxu0 0.0
        %1099 = vmatprep.subr.mxu0 0.0
        %1100 = vmatpush1.msra.mxu0 0.0
        %1101 = vmatprep.subr.mxu0 0.0
        %1102 = vmatpush1.msra.mxu0 0.0
        %1103 = vmatprep.subr.mxu0 0.0
        %1104 = vmatpush1.msra.mxu0 0.0
        %1105 = vmatprep.subr.mxu0 0.0
        %1106 = vmatpush1.msra.mxu0 0.0
        %1107 = vmatprep.subr.mxu0 0.0
        %1108 = vmatpush1.msra.mxu0 0.0
        %1109 = vmatprep.subr.mxu0 0.0
        %1110 = vmatpush1.msra.mxu0 0.0
        %1111 = vmatprep.subr.mxu0 0.0
        %1112 = vmatpush1.msra.mxu0 0.0
        %1113 = vmatprep.subr.mxu0 0.0
        %1114 = vmatpush1.msra.mxu0 0.0
        %1115 = vmatprep.mubr.f32.mxu0 0.0
        %1116 = vmatmul.mubr.f32.gmra.mrb[0].mxu0 %v1049
        %v1117 = vpop.f32.mrb[0].mxu0
        %v1118 = vadd.f32 %v1045, %v1117
        %v1119 = vpop.f32.mrb[0].mxu0
        %1120 = vdwg.mxu0
        %1121 = vrot.lane.b32.xlu0 %v465, 64
        %v1122 = vpop.permute.xlu0 %1121
        %1123 = vrot.lane.b32.xlu0 %v546, 64
        %v1124 = vpop.permute.xlu0 %1123
        %v1125 = vsel %vm394, %v1122, 0
        %v1127 = vsel %vm394, %v1124, 0
        %1129 = vmatprep.subr.mxu0 0.0
        %1130 = vmatpush1.xpose.msra.mxu0 %v1127
        %1131 = vmatprep.subr.mxu0 0.0
        %1132 = vmatpush1.xpose.msra.mxu0 0.0
        %1133 = vmatprep.subr.mxu0 0.0
        %1134 = vmatpush1.xpose.msra.mxu0 0.0
        %1135 = vmatprep.subr.mxu0 0.0
        %1136 = vmatpush1.xpose.msra.mxu0 0.0
        %1137 = vmatprep.subr.mxu0 0.0
        %1138 = vmatpush1.xpose.msra.mxu0 0.0
        %1139 = vmatprep.subr.mxu0 0.0
        %1140 = vmatpush1.xpose.msra.mxu0 0.0
        %1141 = vmatprep.subr.mxu0 0.0
        %1142 = vmatpush1.xpose.msra.mxu0 0.0
        %1143 = vmatprep.subr.mxu0 0.0
        %1144 = vmatpush1.xpose.msra.mxu0 0.0
        %1145 = vmatprep.subr.mxu0 0.0
        %1146 = vmatpush1.xpose.msra.mxu0 0.0
        %1147 = vmatprep.subr.mxu0 0.0
        %1148 = vmatpush1.xpose.msra.mxu0 0.0
        %1149 = vmatprep.subr.mxu0 0.0
        %1150 = vmatpush1.xpose.msra.mxu0 0.0
        %1151 = vmatprep.subr.mxu0 0.0
        %1152 = vmatpush1.xpose.msra.mxu0 0.0
        %1153 = vmatprep.subr.mxu0 0.0
        %1154 = vmatpush1.xpose.msra.mxu0 0.0
        %1155 = vmatprep.subr.mxu0 0.0
        %1156 = vmatpush1.xpose.msra.mxu0 0.0
        %1157 = vmatprep.subr.mxu0 0.0
        %1158 = vmatpush1.xpose.msra.mxu0 0.0
        %1159 = vmatprep.subr.mxu0 0.0
        %1160 = vmatpush1.xpose.msra.mxu0 0.0
        %1161 = vmatprep.subr.mxu0 0.0
        %1162 = vmatpush1.xpose.msra.mxu0 0.0
        %1163 = vmatprep.subr.mxu0 0.0
        %1164 = vmatpush1.xpose.msra.mxu0 0.0
        %1165 = vmatprep.subr.mxu0 0.0
        %1166 = vmatpush1.xpose.msra.mxu0 0.0
        %1167 = vmatprep.subr.mxu0 0.0
        %1168 = vmatpush1.xpose.msra.mxu0 0.0
        %1169 = vmatprep.subr.mxu0 0.0
        %1170 = vmatpush1.xpose.msra.mxu0 0.0
        %1171 = vmatprep.subr.mxu0 0.0
        %1172 = vmatpush1.xpose.msra.mxu0 0.0
        %1173 = vmatprep.subr.mxu0 0.0
        %1174 = vmatpush1.xpose.msra.mxu0 0.0
        %1175 = vmatprep.subr.mxu0 0.0
        %1176 = vmatpush1.xpose.msra.mxu0 0.0
        %1177 = vmatprep.subr.mxu0 0.0
        %1178 = vmatpush1.xpose.msra.mxu0 0.0
        %1179 = vmatprep.subr.mxu0 0.0
        %1180 = vmatpush1.xpose.msra.mxu0 0.0
        %1181 = vmatprep.subr.mxu0 0.0
        %1182 = vmatpush1.xpose.msra.mxu0 0.0
        %1183 = vmatprep.subr.mxu0 0.0
        %1184 = vmatpush1.xpose.msra.mxu0 0.0
        %1185 = vmatprep.subr.mxu0 0.0
        %1186 = vmatpush1.xpose.msra.mxu0 0.0
        %1187 = vmatprep.subr.mxu0 0.0
        %1188 = vmatpush1.xpose.msra.mxu0 0.0
        %1189 = vmatprep.subr.mxu0 0.0
        %1190 = vmatpush1.xpose.msra.mxu0 0.0
        %1191 = vmatprep.subr.mxu0 0.0
        %1192 = vmatpush1.xpose.msra.mxu0 0.0
        %1193 = vmatprep.mubr.f32.mxu0 0.0
        %1194 = vmatmul.mubr.f32.gmra.mrb[0].mxu0 %v1125
        %v1195 = vpop.f32.mrb[0].mxu0
        %v1196 = vadd.f32 0.0, %v1195
        %v1197 = vpop.f32.mrb[0].mxu0
        %1198 = vdwg.mxu0
        %v1199 = vmul.f32 %v1196, 0.17677669
        %v1200 = vsel %vm723, %v1199, -inf
        %1201 = vmax.xlane.f32.xlu0 %v1200
        %v1202 = vpop.xlane.xlu0 %1201
        %v1203 = vsub.f32 %v1199, %v1202
        %v1204 = vmul.f32 %v1203, 1.442695
        %v1205 = vpow.pop %v1204
        %v1206 = vsel %vm723, %v1205, 0.0
        %1207 = vadd.xlane.f32.xlu0 %v1206
        %v1208 = vpop.xlane.xlu0 %1207
        %v1209 = vrcp.pop %v1208
        %v1210 = vmul.f32 %v1205, %v1209
        %1211 = vrot.lane.b32.xlu0 %v627, 64
        %v1212 = vpop.permute.xlu0 %1211
        %v1215 = vsel %vm723, %v1210, 0
        %1217 = vmatprep.subr.mxu0 0.0
        %1218 = vmatpush1.msra.mxu0 %v1212
        %1219 = vmatprep.subr.mxu0 0.0
        %1220 = vmatpush1.msra.mxu0 0.0
        %1221 = vmatprep.subr.mxu0 0.0
        %1222 = vmatpush1.msra.mxu0 0.0
        %1223 = vmatprep.subr.mxu0 0.0
        %1224 = vmatpush1.msra.mxu0 0.0
        %1225 = vmatprep.subr.mxu0 0.0
        %1226 = vmatpush1.msra.mxu0 0.0
        %1227 = vmatprep.subr.mxu0 0.0
        %1228 = vmatpush1.msra.mxu0 0.0
        %1229 = vmatprep.subr.mxu0 0.0
        %1230 = vmatpush1.msra.mxu0 0.0
        %1231 = vmatprep.subr.mxu0 0.0
        %1232 = vmatpush1.msra.mxu0 0.0
        %1233 = vmatprep.subr.mxu0 0.0
        %1234 = vmatpush1.msra.mxu0 0.0
        %1235 = vmatprep.subr.mxu0 0.0
        %1236 = vmatpush1.msra.mxu0 0.0
        %1237 = vmatprep.subr.mxu0 0.0
        %1238 = vmatpush1.msra.mxu0 0.0
        %1239 = vmatprep.subr.mxu0 0.0
        %1240 = vmatpush1.msra.mxu0 0.0
        %1241 = vmatprep.subr.mxu0 0.0
        %1242 = vmatpush1.msra.mxu0 0.0
        %1243 = vmatprep.subr.mxu0 0.0
        %1244 = vmatpush1.msra.mxu0 0.0
        %1245 = vmatprep.subr.mxu0 0.0
        %1246 = vmatpush1.msra.mxu0 0.0
        %1247 = vmatprep.subr.mxu0 0.0
        %1248 = vmatpush1.msra.mxu0 0.0
        %1249 = vmatprep.subr.mxu0 0.0
        %1250 = vmatpush1.msra.mxu0 0.0
        %1251 = vmatprep.subr.mxu0 0.0
        %1252 = vmatpush1.msra.mxu0 0.0
        %1253 = vmatprep.subr.mxu0 0.0
        %1254 = vmatpush1.msra.mxu0 0.0
        %1255 = vmatprep.subr.mxu0 0.0
        %1256 = vmatpush1.msra.mxu0 0.0
        %1257 = vmatprep.subr.mxu0 0.0
        %1258 = vmatpush1.msra.mxu0 0.0
        %1259 = vmatprep.subr.mxu0 0.0
        %1260 = vmatpush1.msra.mxu0 0.0
        %1261 = vmatprep.subr.mxu0 0.0
        %1262 = vmatpush1.msra.mxu0 0.0
        %1263 = vmatprep.subr.mxu0 0.0
        %1264 = vmatpush1.msra.mxu0 0.0
        %1265 = vmatprep.subr.mxu0 0.0
        %1266 = vmatpush1.msra.mxu0 0.0
        %1267 = vmatprep.subr.mxu0 0.0
        %1268 = vmatpush1.msra.mxu0 0.0
        %1269 = vmatprep.subr.mxu0 0.0
        %1270 = vmatpush1.msra.mxu0 0.0
        %1271 = vmatprep.subr.mxu0 0.0
        %1272 = vmatpush1.msra.mxu0 0.0
        %1273 = vmatprep.subr.mxu0 0.0
        %1274 = vmatpush1.msra.mxu0 0.0
        %1275 = vmatprep.subr.mxu0 0.0
        %1276 = vmatpush1.msra.mxu0 0.0
        %1277 = vmatprep.subr.mxu0 0.0
        %1278 = vmatpush1.msra.mxu0 0.0
        %1279 = vmatprep.subr.mxu0 0.0
        %1280 = vmatpush1.msra.mxu0 0.0
        %1281 = vmatprep.mubr.f32.mxu0 0.0
        %1282 = vmatmul.mubr.f32.gmra.mrb[0].mxu0 %v1215
        %v1283 = vpop.f32.mrb[0].mxu0
        %v1284 = vadd.f32 0.0, %v1283
        %v1285 = vpop.f32.mrb[0].mxu0
        %1286 = vdwg.mxu0
        %v1288 = vsel %vm394, %v1284, 0
        %1290 = vmatprep.subr.mxu0 0.0
        %1291 = vmatpush1.msra.mxu0 %v638
        %1292 = vmatprep.subr.mxu0 0.0
        %1293 = vmatpush1.msra.mxu0 %v639
        %1294 = vmatprep.subr.mxu0 0.0
        %1295 = vmatpush1.msra.mxu0 %v640
        %1296 = vmatprep.subr.mxu0 0.0
        %1297 = vmatpush1.msra.mxu0 %v641
        %1298 = vmatprep.subr.mxu0 0.0
        %1299 = vmatpush1.msra.mxu0 0.0
        %1300 = vmatprep.subr.mxu0 0.0
        %1301 = vmatpush1.msra.mxu0 0.0
        %1302 = vmatprep.subr.mxu0 0.0
        %1303 = vmatpush1.msra.mxu0 0.0
        %1304 = vmatprep.subr.mxu0 0.0
        %1305 = vmatpush1.msra.mxu0 0.0
        %1306 = vmatprep.subr.mxu0 0.0
        %1307 = vmatpush1.msra.mxu0 0.0
        %1308 = vmatprep.subr.mxu0 0.0
        %1309 = vmatpush1.msra.mxu0 0.0
        %1310 = vmatprep.subr.mxu0 0.0
        %1311 = vmatpush1.msra.mxu0 0.0
        %1312 = vmatprep.subr.mxu0 0.0
        %1313 = vmatpush1.msra.mxu0 0.0
        %1314 = vmatprep.subr.mxu0 0.0
        %1315 = vmatpush1.msra.mxu0 0.0
        %1316 = vmatprep.subr.mxu0 0.0
        %1317 = vmatpush1.msra.mxu0 0.0
        %1318 = vmatprep.subr.mxu0 0.0
        %1319 = vmatpush1.msra.mxu0 0.0
        %1320 = vmatprep.subr.mxu0 0.0
        %1321 = vmatpush1.msra.mxu0 0.0
        %1322 = vmatprep.subr.mxu0 0.0
        %1323 = vmatpush1.msra.mxu0 0.0
        %1324 = vmatprep.subr.mxu0 0.0
        %1325 = vmatpush1.msra.mxu0 0.0
        %1326 = vmatprep.subr.mxu0 0.0
        %1327 = vmatpush1.msra.mxu0 0.0
        %1328 = vmatprep.subr.mxu0 0.0
        %1329 = vmatpush1.msra.mxu0 0.0
        %1330 = vmatprep.subr.mxu0 0.0
        %1331 = vmatpush1.msra.mxu0 0.0
        %1332 = vmatprep.subr.mxu0 0.0
        %1333 = vmatpush1.msra.mxu0 0.0
        %1334 = vmatprep.subr.mxu0 0.0
        %1335 = vmatpush1.msra.mxu0 0.0
        %1336 = vmatprep.subr.mxu0 0.0
        %1337 = vmatpush1.msra.mxu0 0.0
        %1338 = vmatprep.subr.mxu0 0.0
        %1339 = vmatpush1.msra.mxu0 0.0
        %1340 = vmatprep.subr.mxu0 0.0
        %1341 = vmatpush1.msra.mxu0 0.0
        %1342 = vmatprep.subr.mxu0 0.0
        %1343 = vmatpush1.msra.mxu0 0.0
        %1344 = vmatprep.subr.mxu0 0.0
        %1345 = vmatpush1.msra.mxu0 0.0
        %1346 = vmatprep.subr.mxu0 0.0
        %1347 = vmatpush1.msra.mxu0 0.0
        %1348 = vmatprep.subr.mxu0 0.0
        %1349 = vmatpush1.msra.mxu0 0.0
        %1350 = vmatprep.subr.mxu0 0.0
        %1351 = vmatpush1.msra.mxu0 0.0
        %1352 = vmatprep.subr.mxu0 0.0
        %1353 = vmatpush1.msra.mxu0 0.0
        %1354 = vmatprep.mubr.f32.mxu0 0.0
        %1355 = vmatmul.mubr.f32.gmra.mrb[0].mxu0 %v1288
        %v1356 = vpop.f32.mrb[0].mxu0
        %v1357 = vadd.f32 0.0, %v1356
        %v1358 = vpop.f32.mrb[0].mxu0
        %1359 = vdwg.mxu0
        %v1360 = vadd.f32 %v1118, %v1357
        %1361 = vrot.lane.b32.xlu0 %v465, 32
        %v1362 = vpop.permute.xlu0 %1361
        %1363 = vrot.lane.b32.xlu0 %v546, 32
        %v1364 = vpop.permute.xlu0 %1363
        %v1365 = vsel %vm394, %v1362, 0
        %v1367 = vsel %vm394, %v1364, 0
        %1369 = vmatprep.subr.mxu0 0.0
        %1370 = vmatpush1.xpose.msra.mxu0 %v1367
        %1371 = vmatprep.subr.mxu0 0.0
        %1372 = vmatpush1.xpose.msra.mxu0 0.0
        %1373 = vmatprep.subr.mxu0 0.0
        %1374 = vmatpush1.xpose.msra.mxu0 0.0
        %1375 = vmatprep.subr.mxu0 0.0
        %1376 = vmatpush1.xpose.msra.mxu0 0.0
        %1377 = vmatprep.subr.mxu0 0.0
        %1378 = vmatpush1.xpose.msra.mxu0 0.0
        %1379 = vmatprep.subr.mxu0 0.0
        %1380 = vmatpush1.xpose.msra.mxu0 0.0
        %1381 = vmatprep.subr.mxu0 0.0
        %1382 = vmatpush1.xpose.msra.mxu0 0.0
        %1383 = vmatprep.subr.mxu0 0.0
        %1384 = vmatpush1.xpose.msra.mxu0 0.0
        %1385 = vmatprep.subr.mxu0 0.0
        %1386 = vmatpush1.xpose.msra.mxu0 0.0
        %1387 = vmatprep.subr.mxu0 0.0
        %1388 = vmatpush1.xpose.msra.mxu0 0.0
        %1389 = vmatprep.subr.mxu0 0.0
        %1390 = vmatpush1.xpose.msra.mxu0 0.0
        %1391 = vmatprep.subr.mxu0 0.0
        %1392 = vmatpush1.xpose.msra.mxu0 0.0
        %1393 = vmatprep.subr.mxu0 0.0
        %1394 = vmatpush1.xpose.msra.mxu0 0.0
        %1395 = vmatprep.subr.mxu0 0.0
        %1396 = vmatpush1.xpose.msra.mxu0 0.0
        %1397 = vmatprep.subr.mxu0 0.0
        %1398 = vmatpush1.xpose.msra.mxu0 0.0
        %1399 = vmatprep.subr.mxu0 0.0
        %1400 = vmatpush1.xpose.msra.mxu0 0.0
        %1401 = vmatprep.subr.mxu0 0.0
        %1402 = vmatpush1.xpose.msra.mxu0 0.0
        %1403 = vmatprep.subr.mxu0 0.0
        %1404 = vmatpush1.xpose.msra.mxu0 0.0
        %1405 = vmatprep.subr.mxu0 0.0
        %1406 = vmatpush1.xpose.msra.mxu0 0.0
        %1407 = vmatprep.subr.mxu0 0.0
        %1408 = vmatpush1.xpose.msra.mxu0 0.0
        %1409 = vmatprep.subr.mxu0 0.0
        %1410 = vmatpush1.xpose.msra.mxu0 0.0
        %1411 = vmatprep.subr.mxu0 0.0
        %1412 = vmatpush1.xpose.msra.mxu0 0.0
        %1413 = vmatprep.subr.mxu0 0.0
        %1414 = vmatpush1.xpose.msra.mxu0 0.0
        %1415 = vmatprep.subr.mxu0 0.0
        %1416 = vmatpush1.xpose.msra.mxu0 0.0
        %1417 = vmatprep.subr.mxu0 0.0
        %1418 = vmatpush1.xpose.msra.mxu0 0.0
        %1419 = vmatprep.subr.mxu0 0.0
        %1420 = vmatpush1.xpose.msra.mxu0 0.0
        %1421 = vmatprep.subr.mxu0 0.0
        %1422 = vmatpush1.xpose.msra.mxu0 0.0
        %1423 = vmatprep.subr.mxu0 0.0
        %1424 = vmatpush1.xpose.msra.mxu0 0.0
        %1425 = vmatprep.subr.mxu0 0.0
        %1426 = vmatpush1.xpose.msra.mxu0 0.0
        %1427 = vmatprep.subr.mxu0 0.0
        %1428 = vmatpush1.xpose.msra.mxu0 0.0
        %1429 = vmatprep.subr.mxu0 0.0
        %1430 = vmatpush1.xpose.msra.mxu0 0.0
        %1431 = vmatprep.subr.mxu0 0.0
        %1432 = vmatpush1.xpose.msra.mxu0 0.0
        %1433 = vmatprep.mubr.f32.mxu0 0.0
        %1434 = vmatmul.mubr.f32.gmra.mrb[0].mxu0 %v1365
        %v1435 = vpop.f32.mrb[0].mxu0
        %v1436 = vadd.f32 0.0, %v1435
        %v1437 = vpop.f32.mrb[0].mxu0
        %1438 = vdwg.mxu0
        %v1439 = vmul.f32 %v1436, 0.17677669
        %v1440 = vsel %vm723, %v1439, -inf
        %1441 = vmax.xlane.f32.xlu0 %v1440
        %v1442 = vpop.xlane.xlu0 %1441
        %v1443 = vsub.f32 %v1439, %v1442
        %v1444 = vmul.f32 %v1443, 1.442695
        %v1445 = vpow.pop %v1444
        %v1446 = vsel %vm723, %v1445, 0.0
        %1447 = vadd.xlane.f32.xlu0 %v1446
        %v1448 = vpop.xlane.xlu0 %1447
        %v1449 = vrcp.pop %v1448
        %v1450 = vmul.f32 %v1445, %v1449
        %1451 = vrot.lane.b32.xlu0 %v627, 32
        %v1452 = vpop.permute.xlu0 %1451
        %v1455 = vsel %vm723, %v1450, 0
        %1457 = vmatprep.subr.mxu0 0.0
        %1458 = vmatpush1.msra.mxu0 %v1452
        %1459 = vmatprep.subr.mxu0 0.0
        %1460 = vmatpush1.msra.mxu0 0.0
        %1461 = vmatprep.subr.mxu0 0.0
        %1462 = vmatpush1.msra.mxu0 0.0
        %1463 = vmatprep.subr.mxu0 0.0
        %1464 = vmatpush1.msra.mxu0 0.0
        %1465 = vmatprep.subr.mxu0 0.0
        %1466 = vmatpush1.msra.mxu0 0.0
        %1467 = vmatprep.subr.mxu0 0.0
        %1468 = vmatpush1.msra.mxu0 0.0
        %1469 = vmatprep.subr.mxu0 0.0
        %1470 = vmatpush1.msra.mxu0 0.0
        %1471 = vmatprep.subr.mxu0 0.0
        %1472 = vmatpush1.msra.mxu0 0.0
        %1473 = vmatprep.subr.mxu0 0.0
        %1474 = vmatpush1.msra.mxu0 0.0
        %1475 = vmatprep.subr.mxu0 0.0
        %1476 = vmatpush1.msra.mxu0 0.0
        %1477 = vmatprep.subr.mxu0 0.0
        %1478 = vmatpush1.msra.mxu0 0.0
        %1479 = vmatprep.subr.mxu0 0.0
        %1480 = vmatpush1.msra.mxu0 0.0
        %1481 = vmatprep.subr.mxu0 0.0
        %1482 = vmatpush1.msra.mxu0 0.0
        %1483 = vmatprep.subr.mxu0 0.0
        %1484 = vmatpush1.msra.mxu0 0.0
        %1485 = vmatprep.subr.mxu0 0.0
        %1486 = vmatpush1.msra.mxu0 0.0
        %1487 = vmatprep.subr.mxu0 0.0
        %1488 = vmatpush1.msra.mxu0 0.0
        %1489 = vmatprep.subr.mxu0 0.0
        %1490 = vmatpush1.msra.mxu0 0.0
        %1491 = vmatprep.subr.mxu0 0.0
        %1492 = vmatpush1.msra.mxu0 0.0
        %1493 = vmatprep.subr.mxu0 0.0
        %1494 = vmatpush1.msra.mxu0 0.0
        %1495 = vmatprep.subr.mxu0 0.0
        %1496 = vmatpush1.msra.mxu0 0.0
        %1497 = vmatprep.subr.mxu0 0.0
        %1498 = vmatpush1.msra.mxu0 0.0
        %1499 = vmatprep.subr.mxu0 0.0
        %1500 = vmatpush1.msra.mxu0 0.0
        %1501 = vmatprep.subr.mxu0 0.0
        %1502 = vmatpush1.msra.mxu0 0.0
        %1503 = vmatprep.subr.mxu0 0.0
        %1504 = vmatpush1.msra.mxu0 0.0
        %1505 = vmatprep.subr.mxu0 0.0
        %1506 = vmatpush1.msra.mxu0 0.0
        %1507 = vmatprep.subr.mxu0 0.0
        %1508 = vmatpush1.msra.mxu0 0.0
        %1509 = vmatprep.subr.mxu0 0.0
        %1510 = vmatpush1.msra.mxu0 0.0
        %1511 = vmatprep.subr.mxu0 0.0
        %1512 = vmatpush1.msra.mxu0 0.0
        %1513 = vmatprep.subr.mxu0 0.0
        %1514 = vmatpush1.msra.mxu0 0.0
        %1515 = vmatprep.subr.mxu0 0.0
        %1516 = vmatpush1.msra.mxu0 0.0
        %1517 = vmatprep.subr.mxu0 0.0
        %1518 = vmatpush1.msra.mxu0 0.0
        %1519 = vmatprep.subr.mxu0 0.0
        %1520 = vmatpush1.msra.mxu0 0.0
        %1521 = vmatprep.mubr.f32.mxu0 0.0
        %1522 = vmatmul.mubr.f32.gmra.mrb[0].mxu0 %v1455
        %v1523 = vpop.f32.mrb[0].mxu0
        %v1524 = vadd.f32 0.0, %v1523
        %v1525 = vpop.f32.mrb[0].mxu0
        %1526 = vdwg.mxu0
        %v1528 = vsel %vm394, %v1524, 0
        %1530 = vmatprep.subr.mxu0 0.0
        %1531 = vmatpush1.msra.mxu0 %v642
        %1532 = vmatprep.subr.mxu0 0.0
        %1533 = vmatpush1.msra.mxu0 %v643
        %1534 = vmatprep.subr.mxu0 0.0
        %1535 = vmatpush1.msra.mxu0 %v644
        %1536 = vmatprep.subr.mxu0 0.0
        %1537 = vmatpush1.msra.mxu0 %v645
        %1538 = vmatprep.subr.mxu0 0.0
        %1539 = vmatpush1.msra.mxu0 0.0
        %1540 = vmatprep.subr.mxu0 0.0
        %1541 = vmatpush1.msra.mxu0 0.0
        %1542 = vmatprep.subr.mxu0 0.0
        %1543 = vmatpush1.msra.mxu0 0.0
        %1544 = vmatprep.subr.mxu0 0.0
        %1545 = vmatpush1.msra.mxu0 0.0
        %1546 = vmatprep.subr.mxu0 0.0
        %1547 = vmatpush1.msra.mxu0 0.0
        %1548 = vmatprep.subr.mxu0 0.0
        %1549 = vmatpush1.msra.mxu0 0.0
        %1550 = vmatprep.subr.mxu0 0.0
        %1551 = vmatpush1.msra.mxu0 0.0
        %1552 = vmatprep.subr.mxu0 0.0
        %1553 = vmatpush1.msra.mxu0 0.0
        %1554 = vmatprep.subr.mxu0 0.0
        %1555 = vmatpush1.msra.mxu0 0.0
        %1556 = vmatprep.subr.mxu0 0.0
        %1557 = vmatpush1.msra.mxu0 0.0
        %1558 = vmatprep.subr.mxu0 0.0
        %1559 = vmatpush1.msra.mxu0 0.0
        %1560 = vmatprep.subr.mxu0 0.0
        %1561 = vmatpush1.msra.mxu0 0.0
        %1562 = vmatprep.subr.mxu0 0.0
        %1563 = vmatpush1.msra.mxu0 0.0
        %1564 = vmatprep.subr.mxu0 0.0
        %1565 = vmatpush1.msra.mxu0 0.0
        %1566 = vmatprep.subr.mxu0 0.0
        %1567 = vmatpush1.msra.mxu0 0.0
        %1568 = vmatprep.subr.mxu0 0.0
        %1569 = vmatpush1.msra.mxu0 0.0
        %1570 = vmatprep.subr.mxu0 0.0
        %1571 = vmatpush1.msra.mxu0 0.0
        %1572 = vmatprep.subr.mxu0 0.0
        %1573 = vmatpush1.msra.mxu0 0.0
        %1574 = vmatprep.subr.mxu0 0.0
        %1575 = vmatpush1.msra.mxu0 0.0
        %1576 = vmatprep.subr.mxu0 0.0
        %1577 = vmatpush1.msra.mxu0 0.0
        %1578 = vmatprep.subr.mxu0 0.0
        %1579 = vmatpush1.msra.mxu0 0.0
        %1580 = vmatprep.subr.mxu0 0.0
        %1581 = vmatpush1.msra.mxu0 0.0
        %1582 = vmatprep.subr.mxu0 0.0
        %1583 = vmatpush1.msra.mxu0 0.0
        %1584 = vmatprep.subr.mxu0 0.0
        %1585 = vmatpush1.msra.mxu0 0.0
        %1586 = vmatprep.subr.mxu0 0.0
        %1587 = vmatpush1.msra.mxu0 0.0
        %1588 = vmatprep.subr.mxu0 0.0
        %1589 = vmatpush1.msra.mxu0 0.0
        %1590 = vmatprep.subr.mxu0 0.0
        %1591 = vmatpush1.msra.mxu0 0.0
        %1592 = vmatprep.subr.mxu0 0.0
        %1593 = vmatpush1.msra.mxu0 0.0
        %1594 = vmatprep.mubr.f32.mxu0 0.0
        %1595 = vmatmul.mubr.f32.gmra.mrb[0].mxu0 %v1528
        %v1596 = vpop.f32.mrb[0].mxu0
        %v1597 = vadd.f32 0.0, %v1596
        %v1598 = vpop.f32.mrb[0].mxu0
        %1599 = vdwg.mxu0
        %v1600 = vadd.f32 %v1360, %v1597
        %v1601 = vld [vmem:[%s8] sm:$0x1]
        %v1603 = vlaneseq
        %v1604 = vshrl.u32 %v1603, 7
        %v1605 = vsub.s32 0, %v1604
        %v1606 = vrot.slane %v1601, %v1605
        %v1608 = vadd.f32 %v1600, %v1606
        %v1609 = vadd.f32 %v1608, %v382
        %v1610 = vsel %vm394, %v1609, 0.0
        %1611 = vadd.xlane.f32.xlu0 %v1610
        %v1612 = vpop.xlane.xlu0 %1611
        %v1613 = vrcp.pop 32.0
        %v1614 = vmul.f32 %v1612, %v1613
        %v1615 = vsub.f32 %v1609, %v1614
        %v1616 = vmul.f32 %v1615, %v1615
        %v1617 = vsel %vm394, %v1616, 0.0
        %1618 = vadd.xlane.f32.xlu0 %v1617
        %v1619 = vpop.xlane.xlu0 %1618
        %v1620 = vmul.f32 %v1619, %v1613
        %v1621 = vadd.f32 %v1620, 1e-12
        %v1622 = vrsqrt.pop %v1621
        %v1623 = vmul.f32 %v1615, %v1622
        %v1624 = vld [vmem:[%s9] sm:$0x1]
        %v1626 = vlaneseq
        %v1627 = vshrl.u32 %v1626, 7
        %v1628 = vsub.s32 0, %v1627
        %v1629 = vrot.slane %v1624, %v1628
        %v1631 = vmul.f32 %v1629, %v1623
        %v1632 = vld [vmem:[%s10] sm:$0x1]
        %v1634 = vlaneseq
        %v1635 = vshrl.u32 %v1634, 7
        %v1636 = vsub.s32 0, %v1635
        %v1637 = vrot.slane %v1632, %v1636
        %v1639 = vadd.f32 %v1631, %v1637
        %1640 = vst.msk [vmem:[%s377] sm:$0xff] %vm394, %v1639
        %s1641 = sand.u32 %s269, 1
        %s1642 = scalar_lea.sflag [#allocation3], %s1641
        %s1643 = sand.u32 %s269, 1
        %s1644 = smul.addr %s1643, 8
        %s1645 = scalar_lea.vmem [#allocation2], %s1644
        // Predicated region
        $region65: #{tpu_custom_call.1} parent=63 // pred_check
          %p1646 = pneg %p279
        $region66: #{tpu_custom_call.1} parent=63 // pred_check_branch
          %1648 = sbr.rel (%p1646) target = $region68
        $region67: #{tpu_custom_call.1} parent=63 // pred_region
          %s1650 = ssub.s32 128, 128
          %1651 = vsyncadd %s1642, %s1650
          %s1652 = smul.addr %s25, 128
          %s1653 = scalar_lea.hbm %s11, %s1652
          %s1655 = sshll.u32 %s1645, 4
          %s1656 = int_to_ptr.vmem [resolvable:$true] %s1655
          %1658 = dma.vmem_to_hbm [thread:$0]  %s1656, 128, %s1653, %s1642
        $region68: #{tpu_custom_call.1} parent=63 // pred_fallthru
          _
      $region64: #{tpu_custom_call.1} parent=5 // pred_fallthru
        _
      %p1659 = scmp.le.s32.totalorder 2, %s20
      // Predicated region
      $region69: #{tpu_custom_call.1} parent=5 // pred_check
        %p1660 = pneg %p1659
      $region70: #{tpu_custom_call.1} parent=5 // pred_check_branch
        %1662 = sbr.rel (%p1660) target = $region72
      $region71: #{tpu_custom_call.1} parent=5 // pred_region
        %s1663 = ssub.s32 %s20, 2
        // Predicated region
        $region73: #{tpu_custom_call.1} parent=71 // pred_check
          %p1664 = pneg %p285
        $region74: #{tpu_custom_call.1} parent=71 // pred_check_branch
          %1666 = sbr.rel (%p1664) target = $region76
        $region75: #{tpu_custom_call.1} parent=71 // pred_region
          %s1667 = sand.u32 %s270, 1
          %s1668 = scalar_lea.sflag [#allocation3], %s1667
          %s1669 = sand.u32 %s270, 1
          %s1670 = smul.addr %s1669, 8
          %s1671 = scalar_lea.vmem [#allocation2], %s1670
          %1672 = dma.done %s1668, 128
        $region76: #{tpu_custom_call.1} parent=71 // pred_fallthru
          _
      $region72: #{tpu_custom_call.1} parent=5 // pred_fallthru
        _
    $region6: #{tpu_custom_call.1} parent=1 // loop_footer
      %s24 = sadd.s32 1, %s20
    $region7: #{tpu_custom_call.1} parent=1 // loop_footer_branch
      %19 = sbr.rel target = $region3
    $region8: #{tpu_custom_call.1} parent=1 // loop_exit
      _
    %1673 = vsyncpa [#allocation3], 1
    %s1674 = scalar_lea.sflag [#allocation3], 1
    %1675 = vsyncpa %s1674, 1

</llo_original>
